<compile_context>
chip_gen: v7x
topology: tpu7x:2x2x1
jax: 0.10.0
libtpu: 0.0.40
codegen_flags: <defaults>
</compile_context>

<pallas_src>
import functools

import jax
import jax.numpy as jnp
from jax.experimental import pallas as pl
from jax.experimental.pallas import tpu as pltpu

HIDDEN = 768        # BERT-base hidden size
FF = 1024           # lin1 out features
NUM_CLASSES = 4     # lin2 out features (punctuation classes)
C_PAD = 128         # class dim padded to one full lane width


def _head_kernel(x_ref, w1_ref, b1_ref, w2_ref, b2_ref, o_ref):
    # x_ref:  (tm, 768)   bf16      w1_ref: (768, 1024) bf16
    # b1_ref: (1, 1024)   f32       w2_ref: (1024, 128) f32 (cols 4..127 zero)
    # b2_ref: (1, 128)    f32       o_ref:  (tm, 128)   f32
    h = jnp.dot(x_ref[...], w1_ref[...], preferred_element_type=jnp.float32)
    h = jnp.maximum(h + b1_ref[...], 0.0)                      # bias + ReLU on VPU, f32
    out = jnp.dot(h, w2_ref[...], preferred_element_type=jnp.float32) + b2_ref[...]
    o_ref[...] = out.astype(o_ref.dtype)                       # lane-dense (tm,128) store


@functools.partial(jax.jit, static_argnames=("tm",))
def punct_head(last_hidden, w1, b1, w2, b2, *, tm=512):
    """last_hidden: [B, S, 768] (bf16 or f32) -> logits [B, S-2, 4] float32."""
    B, S, H = last_hidden.shape
    assert H == HIDDEN
    M = B * S

    # Free reshape (contiguous bitcast) -- the token slice is NOT done on the
    # 768-wide activation; it is done on the tiny logits tensor at the end.
    x = last_hidden.reshape(M, H)
    if x.dtype != jnp.bfloat16:
        # In the real pipeline the encoder emits bf16 / this fuses with its
        # producer; kept here only for f32 callers.
        x = x.astype(jnp.bfloat16)

    # Row tile: multiple of 8 (512 default) or the full dim for small inputs.
    if M <= tm:
        tm = M

    w1b = w1.astype(jnp.bfloat16)
    b1_2d = b1.reshape(1, FF).astype(jnp.float32)
    # Pad class dim 4 -> 128 (tiny, one-time) so stores are unmasked.
    w2p = jnp.zeros((FF, C_PAD), jnp.float32).at[:, :NUM_CLASSES].set(
        w2.astype(jnp.float32))
    b2p = jnp.zeros((1, C_PAD), jnp.float32).at[0, :NUM_CLASSES].set(
        b2.astype(jnp.float32))

    grid = (pl.cdiv(M, tm),)

    flops = 2 * M * HIDDEN * FF + 2 * M * FF * C_PAD
    bytes_accessed = (M * HIDDEN * 2          # x (bf16)
                      + HIDDEN * FF * 2       # W1 (bf16)
                      + FF * 4                # b1
                      + FF * C_PAD * 4        # W2 padded
                      + C_PAD * 4             # b2 padded
                      + M * C_PAD * 4)        # out

    out = pl.pallas_call(
        _head_kernel,
        out_shape=jax.ShapeDtypeStruct((M, C_PAD), jnp.float32),
        grid_spec=pltpu.PrefetchScalarGridSpec(
            num_scalar_prefetch=0,
            grid=grid,
            in_specs=[
                pl.BlockSpec((tm, HIDDEN), lambda i: (i, 0)),       # x rows tiled
                pl.BlockSpec((HIDDEN, FF), lambda i: (0, 0)),       # W1 resident
                pl.BlockSpec((1, FF), lambda i: (0, 0)),            # b1
                pl.BlockSpec((FF, C_PAD), lambda i: (0, 0)),        # W2 (padded) resident
                pl.BlockSpec((1, C_PAD), lambda i: (0, 0)),         # b2 (padded)
            ],
            out_specs=pl.BlockSpec((tm, C_PAD), lambda i: (i, 0)),
        ),
        compiler_params=pltpu.CompilerParams(
            dimension_semantics=("parallel",),
        ),
        cost_estimate=pl.CostEstimate(
            flops=flops, transcendentals=0, bytes_accessed=bytes_accessed),
    )(x, w1b, b1_2d, w2p, b2p)

    # Drop padded class lanes and the [CLS] / final special token -- both
    # slices act on the small logits tensor, not the 768-wide activation.
    return out.reshape(B, S, C_PAD)[:, 1:-1, :NUM_CLASSES]


def init_params(key):
    """Params matching nn.Linear(768,1024) / nn.Linear(1024,4) default init:
    U(-1/sqrt(fan_in), 1/sqrt(fan_in)); stored as (in, out) so the kernel
    computes x @ W directly."""
    k1, k2, k3, k4 = jax.random.split(key, 4)
    lim1 = 1.0 / jnp.sqrt(jnp.float32(HIDDEN))
    lim2 = 1.0 / jnp.sqrt(jnp.float32(FF))
    w1 = jax.random.uniform(k1, (HIDDEN, FF), jnp.float32, -lim1, lim1)
    b1 = jax.random.uniform(k2, (FF,), jnp.float32, -lim1, lim1)
    w2 = jax.random.uniform(k3, (FF, NUM_CLASSES), jnp.float32, -lim2, lim2)
    b2 = jax.random.uniform(k4, (NUM_CLASSES,), jnp.float32, -lim2, lim2)
    return w1, b1, w2, b2


def reference(last_hidden, w1, b1, w2, b2):
    x = last_hidden.astype(jnp.float32)[:, 1:-1, :]
    h = jnp.maximum(x @ w1 + b1, 0.0)
    return h @ w2 + b2


if __name__ == "__main__":
    key = jax.random.PRNGKey(0)
    k_in, k_par = jax.random.split(key)

    B, S = 2, 8  # small shapes; S includes [CLS] and the final special token
    # Synthetic BERT last_hidden_state (stands in for bert_last_hidden output);
    # emitted in bf16, as the real encoder would be on TPU.
    last_hidden = jax.random.normal(
        k_in, (B, S, HIDDEN), jnp.float32).astype(jnp.bfloat16)
    w1, b1, w2, b2 = init_params(k_par)

    out = punct_head(last_hidden, w1, b1, w2, b2)
    out = jax.block_until_ready(out)

    ref = reference(last_hidden, w1, b1, w2, b2)
    assert out.shape == (B, S - 2, NUM_CLASSES), out.shape
    # bf16 x/W1 vs f32 reference -> loosened tolerance
    assert jnp.allclose(out, ref, atol=5e-2, rtol=5e-2), float(
        jnp.max(jnp.abs(out - ref)))

    print("KERNEL_OK")
</pallas_src>

<mosaic_0001>
module attributes {stable_mosaic.version = 11 : i64} {
  func.func @_head_kernel(%arg0: i32, %arg1: memref<16x768xbf16, #tpu.memory_space<vmem>>, %arg2: memref<768x1024xbf16, #tpu.memory_space<vmem>>, %arg3: memref<1x1024xf32, #tpu.memory_space<vmem>>, %arg4: memref<1024x128xf32, #tpu.memory_space<vmem>>, %arg5: memref<1x128xf32, #tpu.memory_space<vmem>>, %arg6: memref<16x128xf32, #tpu.memory_space<vmem>>) attributes {dimension_semantics = [#tpu.dimension_semantics<parallel>], iteration_bounds = array<i64: 1>, scalar_prefetch = 0 : i64, scratch_operands = 0 : i64, tpu.core_type = #tpu.core_type<tc>, window_params = [{transform_indices = @transform_0, window_bounds = array<i64: 16, 768>}, {pipeline_mode = #tpu.pipeline_mode<synchronous>, transform_indices = @transform_1, window_bounds = array<i64: 768, 1024>}, {pipeline_mode = #tpu.pipeline_mode<synchronous>, transform_indices = @transform_2, window_bounds = array<i64: 1, 1024>}, {pipeline_mode = #tpu.pipeline_mode<synchronous>, transform_indices = @transform_3, window_bounds = array<i64: 1024, 128>}, {pipeline_mode = #tpu.pipeline_mode<synchronous>, transform_indices = @transform_4, window_bounds = array<i64: 1, 128>}, {transform_indices = @transform_5, window_bounds = array<i64: 16, 128>}]} {
    %c0 = arith.constant 0 : index
    %c0_0 = arith.constant 0 : index
    %0 = vector.load %arg1[%c0, %c0_0] : memref<16x768xbf16, #tpu.memory_space<vmem>>, vector<16x768xbf16>
    %c0_1 = arith.constant 0 : index
    %c0_2 = arith.constant 0 : index
    %1 = vector.load %arg2[%c0_1, %c0_2] : memref<768x1024xbf16, #tpu.memory_space<vmem>>, vector<768x1024xbf16>
    %cst = arith.constant dense<0.000000e+00> : vector<16x1024xf32>
    %2 = tpu.matmul %0, %1, %cst {dimension_numbers = #tpu.dot_dimension_numbers<[1], [0], [0], [1], [0, 0, 1, 1], [], []>} : vector<16x768xbf16>, vector<768x1024xbf16>, vector<16x1024xf32> -> vector<16x1024xf32>
    %c0_3 = arith.constant 0 : index
    %c0_4 = arith.constant 0 : index
    %3 = vector.load %arg3[%c0_3, %c0_4] : memref<1x1024xf32, #tpu.memory_space<vmem>>, vector<1x1024xf32>
    %4 = vector.broadcast %3 : vector<1x1024xf32> to vector<16x1024xf32>
    %5 = arith.addf %2, %4 : vector<16x1024xf32>
    %cst_5 = arith.constant 0.000000e+00 : f32
    %6 = vector.broadcast %cst_5 : f32 to vector<16x1024xf32>
    %7 = arith.maximumf %5, %6 : vector<16x1024xf32>
    %c0_6 = arith.constant 0 : index
    %c0_7 = arith.constant 0 : index
    %8 = vector.load %arg4[%c0_6, %c0_7] : memref<1024x128xf32, #tpu.memory_space<vmem>>, vector<1024x128xf32>
    %cst_8 = arith.constant dense<0.000000e+00> : vector<16x128xf32>
    %9 = tpu.matmul %7, %8, %cst_8 {dimension_numbers = #tpu.dot_dimension_numbers<[1], [0], [0], [1], [0, 0, 1, 1], [], []>} : vector<16x1024xf32>, vector<1024x128xf32>, vector<16x128xf32> -> vector<16x128xf32>
    %c0_9 = arith.constant 0 : index
    %c0_10 = arith.constant 0 : index
    %10 = vector.load %arg5[%c0_9, %c0_10] : memref<1x128xf32, #tpu.memory_space<vmem>>, vector<1x128xf32>
    %11 = vector.broadcast %10 : vector<1x128xf32> to vector<16x128xf32>
    %12 = arith.addf %9, %11 : vector<16x128xf32>
    %c0_11 = arith.constant 0 : index
    %c0_12 = arith.constant 0 : index
    %13 = vector.load %arg6[%c0_11, %c0_12] : memref<16x128xf32, #tpu.memory_space<vmem>>, vector<16x128xf32>
    tpu.vector_store %arg6[%c0_11, %c0_12], %12 {strides = array<i32>} : memref<16x128xf32, #tpu.memory_space<vmem>>, vector<16x128xf32>,
    return
  }
  func.func @transform_0(%arg0: i32) -> (i32, i32) {
    %c0_i32 = arith.constant 0 : i32
    %c0_i32_0 = arith.constant 0 : i32
    return %arg0, %c0_i32 : i32, i32
  }
  func.func @transform_1(%arg0: i32) -> (i32, i32) {
    %c0_i32 = arith.constant 0 : i32
    %c0_i32_0 = arith.constant 0 : i32
    %c0_i32_1 = arith.constant 0 : i32
    return %c0_i32, %c0_i32_0 : i32, i32
  }
  func.func @transform_2(%arg0: i32) -> (i32, i32) {
    %c0_i32 = arith.constant 0 : i32
    %c0_i32_0 = arith.constant 0 : i32
    %c0_i32_1 = arith.constant 0 : i32
    return %c0_i32, %c0_i32_0 : i32, i32
  }
  func.func @transform_3(%arg0: i32) -> (i32, i32) {
    %c0_i32 = arith.constant 0 : i32
    %c0_i32_0 = arith.constant 0 : i32
    %c0_i32_1 = arith.constant 0 : i32
    return %c0_i32, %c0_i32_0 : i32, i32
  }
  func.func @transform_4(%arg0: i32) -> (i32, i32) {
    %c0_i32 = arith.constant 0 : i32
    %c0_i32_0 = arith.constant 0 : i32
    %c0_i32_1 = arith.constant 0 : i32
    return %c0_i32, %c0_i32_0 : i32, i32
  }
  func.func @transform_5(%arg0: i32) -> (i32, i32) {
    %c0_i32 = arith.constant 0 : i32
    %c0_i32_0 = arith.constant 0 : i32
    return %arg0, %c0_i32 : i32, i32
  }
}

</mosaic_0001>

<llo_original>
// kernel: punct_head.1
$region0: #{punct_head.1}
  #allocation0 [shape = 'u32[]', space=smem, size = 0x4, offset = 0x4, fixed_abs, tag = 'smem constant byte address 0x4 - core index']
  #allocation1 [shape = 'u32[144,128]{1,0:T(1,128)}', space=vmem, size = 0x12000, scoped, tag = 'internal scratch']
  %s0 = inlined_call_operand.vmem [shape: bf16[16,768], index: 0, kind: input, shape index: {}]
  %s1 = inlined_call_operand.vmem [shape: bf16[768,1024], index: 1, kind: input, shape index: {}]
  %s2 = inlined_call_operand.vmem [shape: f32[1,1024], index: 2, kind: input, shape index: {}]
  %s3 = inlined_call_operand.vmem [shape: f32[1024,128], index: 3, kind: input, shape index: {}]
  %s4 = inlined_call_operand.vmem [shape: f32[1,128], index: 4, kind: input, shape index: {}]
  %s5 = inlined_call_operand.vmem [shape: f32[16,128], index: 5, kind: output, shape index: {}]
  %s6 = sld [smem:[#allocation0]]
  $region30: #{punct_head.1} parent=0
    _
  %s8 = ssub.s32 1, %s6
  %s9 = scalar_select 0, %s8, %s6
  // Predicated region
  $region2: #{punct_head.1} parent=0 // pred_check
    _
  $region3: #{punct_head.1} parent=0 // pred_check_branch
    %11 = sbr.rel (0) target = $region5
  $region4: #{punct_head.1} parent=0 // pred_region
    _
  $region5: #{punct_head.1} parent=0 // pred_fallthru
    _
  // Predicated region
  $region6: #{punct_head.1} parent=0 // pred_check
    _
  $region7: #{punct_head.1} parent=0 // pred_check_branch
    %13 = sbr.rel (0) target = $region9
  $region8: #{punct_head.1} parent=0 // pred_region
    _
  $region9: #{punct_head.1} parent=0 // pred_fallthru
    _
  // Predicated region
  $region10: #{punct_head.1} parent=0 // pred_check
    _
  $region11: #{punct_head.1} parent=0 // pred_check_branch
    %15 = sbr.rel (0) target = $region13
  $region12: #{punct_head.1} parent=0 // pred_region
    _
  $region13: #{punct_head.1} parent=0 // pred_fallthru
    _
  // Predicated region
  $region14: #{punct_head.1} parent=0 // pred_check
    _
  $region15: #{punct_head.1} parent=0 // pred_check_branch
    %17 = sbr.rel (0) target = $region17
  $region16: #{punct_head.1} parent=0 // pred_region
    _
  $region17: #{punct_head.1} parent=0 // pred_fallthru
    _
  // Predicated region
  $region18: #{punct_head.1} parent=0 // pred_check
    _
  $region19: #{punct_head.1} parent=0 // pred_check_branch
    %19 = sbr.rel (0) target = $region21
  $region20: #{punct_head.1} parent=0 // pred_region
    _
  $region21: #{punct_head.1} parent=0 // pred_fallthru
    _
  %v20 = vld [vmem:[%s0] sm:$0xff]
  %v21 = vld [vmem:[%s0 + $0x8] sm:$0xff]
  %v22 = vld [vmem:[%s0 + $0x10] sm:$0xff]
  %v23 = vld [vmem:[%s0 + $0x18] sm:$0xff]
  %v24 = vld [vmem:[%s0 + $0x20] sm:$0xff]
  %v25 = vld [vmem:[%s0 + $0x28] sm:$0xff]
  %v26 = vld [vmem:[%s1] sm:$0xff]
  %v27 = vld [vmem:[%s1 + $0x8] sm:$0xff]
  %v28 = vld [vmem:[%s1 + $0x10] sm:$0xff]
  %v29 = vld [vmem:[%s1 + $0x18] sm:$0xff]
  %v30 = vld [vmem:[%s1 + $0x20] sm:$0xff]
  %v31 = vld [vmem:[%s1 + $0x28] sm:$0xff]
  %v32 = vld [vmem:[%s1 + $0x30] sm:$0xff]
  %v33 = vld [vmem:[%s1 + $0x38] sm:$0xff]
  %v34 = vld [vmem:[%s1 + $0x40] sm:$0xff]
  %v35 = vld [vmem:[%s1 + $0x48] sm:$0xff]
  %v36 = vld [vmem:[%s1 + $0x50] sm:$0xff]
  %v37 = vld [vmem:[%s1 + $0x58] sm:$0xff]
  %v38 = vld [vmem:[%s1 + $0x60] sm:$0xff]
  %v39 = vld [vmem:[%s1 + $0x68] sm:$0xff]
  %v40 = vld [vmem:[%s1 + $0x70] sm:$0xff]
  %v41 = vld [vmem:[%s1 + $0x78] sm:$0xff]
  %v42 = vld [vmem:[%s1 + $0x80] sm:$0xff]
  %v43 = vld [vmem:[%s1 + $0x88] sm:$0xff]
  %v44 = vld [vmem:[%s1 + $0x90] sm:$0xff]
  %v45 = vld [vmem:[%s1 + $0x98] sm:$0xff]
  %v46 = vld [vmem:[%s1 + $0xa0] sm:$0xff]
  %v47 = vld [vmem:[%s1 + $0xa8] sm:$0xff]
  %v48 = vld [vmem:[%s1 + $0xb0] sm:$0xff]
  %v49 = vld [vmem:[%s1 + $0xb8] sm:$0xff]
  %v50 = vld [vmem:[%s1 + $0xc0] sm:$0xff]
  %v51 = vld [vmem:[%s1 + $0xc8] sm:$0xff]
  %v52 = vld [vmem:[%s1 + $0xd0] sm:$0xff]
  %v53 = vld [vmem:[%s1 + $0xd8] sm:$0xff]
  %v54 = vld [vmem:[%s1 + $0xe0] sm:$0xff]
  %v55 = vld [vmem:[%s1 + $0xe8] sm:$0xff]
  %v56 = vld [vmem:[%s1 + $0xf0] sm:$0xff]
  %v57 = vld [vmem:[%s1 + $0xf8] sm:$0xff]
  %v58 = vld [vmem:[%s1 + $0x100] sm:$0xff]
  %v59 = vld [vmem:[%s1 + $0x108] sm:$0xff]
  %v60 = vld [vmem:[%s1 + $0x110] sm:$0xff]
  %v61 = vld [vmem:[%s1 + $0x118] sm:$0xff]
  %v62 = vld [vmem:[%s1 + $0x120] sm:$0xff]
  %v63 = vld [vmem:[%s1 + $0x128] sm:$0xff]
  %v64 = vld [vmem:[%s1 + $0x130] sm:$0xff]
  %v65 = vld [vmem:[%s1 + $0x138] sm:$0xff]
  %v66 = vld [vmem:[%s1 + $0x140] sm:$0xff]
  %v67 = vld [vmem:[%s1 + $0x148] sm:$0xff]
  %v68 = vld [vmem:[%s1 + $0x150] sm:$0xff]
  %v69 = vld [vmem:[%s1 + $0x158] sm:$0xff]
  %v70 = vld [vmem:[%s1 + $0x160] sm:$0xff]
  %v71 = vld [vmem:[%s1 + $0x168] sm:$0xff]
  %v72 = vld [vmem:[%s1 + $0x170] sm:$0xff]
  %v73 = vld [vmem:[%s1 + $0x178] sm:$0xff]
  %v74 = vld [vmem:[%s1 + $0x180] sm:$0xff]
  %v75 = vld [vmem:[%s1 + $0x188] sm:$0xff]
  %v76 = vld [vmem:[%s1 + $0x190] sm:$0xff]
  %v77 = vld [vmem:[%s1 + $0x198] sm:$0xff]
  %v78 = vld [vmem:[%s1 + $0x1a0] sm:$0xff]
  %v79 = vld [vmem:[%s1 + $0x1a8] sm:$0xff]
  %v80 = vld [vmem:[%s1 + $0x1b0] sm:$0xff]
  %v81 = vld [vmem:[%s1 + $0x1b8] sm:$0xff]
  %v82 = vld [vmem:[%s1 + $0x1c0] sm:$0xff]
  %v83 = vld [vmem:[%s1 + $0x1c8] sm:$0xff]
  %v84 = vld [vmem:[%s1 + $0x1d0] sm:$0xff]
  %v85 = vld [vmem:[%s1 + $0x1d8] sm:$0xff]
  %v86 = vld [vmem:[%s1 + $0x1e0] sm:$0xff]
  %v87 = vld [vmem:[%s1 + $0x1e8] sm:$0xff]
  %v88 = vld [vmem:[%s1 + $0x1f0] sm:$0xff]
  %v89 = vld [vmem:[%s1 + $0x1f8] sm:$0xff]
  %v90 = vld [vmem:[%s1 + $0x200] sm:$0xff]
  %v91 = vld [vmem:[%s1 + $0x208] sm:$0xff]
  %v92 = vld [vmem:[%s1 + $0x210] sm:$0xff]
  %v93 = vld [vmem:[%s1 + $0x218] sm:$0xff]
  %v94 = vld [vmem:[%s1 + $0x220] sm:$0xff]
  %v95 = vld [vmem:[%s1 + $0x228] sm:$0xff]
  %v96 = vld [vmem:[%s1 + $0x230] sm:$0xff]
  %v97 = vld [vmem:[%s1 + $0x238] sm:$0xff]
  %v98 = vld [vmem:[%s1 + $0x240] sm:$0xff]
  %v99 = vld [vmem:[%s1 + $0x248] sm:$0xff]
  %v100 = vld [vmem:[%s1 + $0x250] sm:$0xff]
  %v101 = vld [vmem:[%s1 + $0x258] sm:$0xff]
  %v102 = vld [vmem:[%s1 + $0x260] sm:$0xff]
  %v103 = vld [vmem:[%s1 + $0x268] sm:$0xff]
  %v104 = vld [vmem:[%s1 + $0x270] sm:$0xff]
  %v105 = vld [vmem:[%s1 + $0x278] sm:$0xff]
  %v106 = vld [vmem:[%s1 + $0x280] sm:$0xff]
  %v107 = vld [vmem:[%s1 + $0x288] sm:$0xff]
  %v108 = vld [vmem:[%s1 + $0x290] sm:$0xff]
  %v109 = vld [vmem:[%s1 + $0x298] sm:$0xff]
  %v110 = vld [vmem:[%s1 + $0x2a0] sm:$0xff]
  %v111 = vld [vmem:[%s1 + $0x2a8] sm:$0xff]
  %v112 = vld [vmem:[%s1 + $0x2b0] sm:$0xff]
  %v113 = vld [vmem:[%s1 + $0x2b8] sm:$0xff]
  %v114 = vld [vmem:[%s1 + $0x2c0] sm:$0xff]
  %v115 = vld [vmem:[%s1 + $0x2c8] sm:$0xff]
  %v116 = vld [vmem:[%s1 + $0x2d0] sm:$0xff]
  %v117 = vld [vmem:[%s1 + $0x2d8] sm:$0xff]
  %v118 = vld [vmem:[%s1 + $0x2e0] sm:$0xff]
  %v119 = vld [vmem:[%s1 + $0x2e8] sm:$0xff]
  %v120 = vld [vmem:[%s1 + $0x2f0] sm:$0xff]
  %v121 = vld [vmem:[%s1 + $0x2f8] sm:$0xff]
  %v122 = vld [vmem:[%s1 + $0x300] sm:$0xff]
  %v123 = vld [vmem:[%s1 + $0x308] sm:$0xff]
  %v124 = vld [vmem:[%s1 + $0x310] sm:$0xff]
  %v125 = vld [vmem:[%s1 + $0x318] sm:$0xff]
  %v126 = vld [vmem:[%s1 + $0x320] sm:$0xff]
  %v127 = vld [vmem:[%s1 + $0x328] sm:$0xff]
  %v128 = vld [vmem:[%s1 + $0x330] sm:$0xff]
  %v129 = vld [vmem:[%s1 + $0x338] sm:$0xff]
  %v130 = vld [vmem:[%s1 + $0x340] sm:$0xff]
  %v131 = vld [vmem:[%s1 + $0x348] sm:$0xff]
  %v132 = vld [vmem:[%s1 + $0x350] sm:$0xff]
  %v133 = vld [vmem:[%s1 + $0x358] sm:$0xff]
  %v134 = vld [vmem:[%s1 + $0x360] sm:$0xff]
  %v135 = vld [vmem:[%s1 + $0x368] sm:$0xff]
  %v136 = vld [vmem:[%s1 + $0x370] sm:$0xff]
  %v137 = vld [vmem:[%s1 + $0x378] sm:$0xff]
  %v138 = vld [vmem:[%s1 + $0x380] sm:$0xff]
  %v139 = vld [vmem:[%s1 + $0x388] sm:$0xff]
  %v140 = vld [vmem:[%s1 + $0x390] sm:$0xff]
  %v141 = vld [vmem:[%s1 + $0x398] sm:$0xff]
  %v142 = vld [vmem:[%s1 + $0x3a0] sm:$0xff]
  %v143 = vld [vmem:[%s1 + $0x3a8] sm:$0xff]
  %v144 = vld [vmem:[%s1 + $0x3b0] sm:$0xff]
  %v145 = vld [vmem:[%s1 + $0x3b8] sm:$0xff]
  %v146 = vld [vmem:[%s1 + $0x3c0] sm:$0xff]
  %v147 = vld [vmem:[%s1 + $0x3c8] sm:$0xff]
  %v148 = vld [vmem:[%s1 + $0x3d0] sm:$0xff]
  %v149 = vld [vmem:[%s1 + $0x3d8] sm:$0xff]
  %v150 = vld [vmem:[%s1 + $0x3e0] sm:$0xff]
  %v151 = vld [vmem:[%s1 + $0x3e8] sm:$0xff]
  %v152 = vld [vmem:[%s1 + $0x3f0] sm:$0xff]
  %v153 = vld [vmem:[%s1 + $0x3f8] sm:$0xff]
  %v154 = vld [vmem:[%s1 + $0x400] sm:$0xff]
  %v155 = vld [vmem:[%s1 + $0x408] sm:$0xff]
  %v156 = vld [vmem:[%s1 + $0x410] sm:$0xff]
  %v157 = vld [vmem:[%s1 + $0x418] sm:$0xff]
  %v158 = vld [vmem:[%s1 + $0x420] sm:$0xff]
  %v159 = vld [vmem:[%s1 + $0x428] sm:$0xff]
  %v160 = vld [vmem:[%s1 + $0x430] sm:$0xff]
  %v161 = vld [vmem:[%s1 + $0x438] sm:$0xff]
  %v162 = vld [vmem:[%s1 + $0x440] sm:$0xff]
  %v163 = vld [vmem:[%s1 + $0x448] sm:$0xff]
  %v164 = vld [vmem:[%s1 + $0x450] sm:$0xff]
  %v165 = vld [vmem:[%s1 + $0x458] sm:$0xff]
  %v166 = vld [vmem:[%s1 + $0x460] sm:$0xff]
  %v167 = vld [vmem:[%s1 + $0x468] sm:$0xff]
  %v168 = vld [vmem:[%s1 + $0x470] sm:$0xff]
  %v169 = vld [vmem:[%s1 + $0x478] sm:$0xff]
  %v170 = vld [vmem:[%s1 + $0x480] sm:$0xff]
  %v171 = vld [vmem:[%s1 + $0x488] sm:$0xff]
  %v172 = vld [vmem:[%s1 + $0x490] sm:$0xff]
  %v173 = vld [vmem:[%s1 + $0x498] sm:$0xff]
  %v174 = vld [vmem:[%s1 + $0x4a0] sm:$0xff]
  %v175 = vld [vmem:[%s1 + $0x4a8] sm:$0xff]
  %v176 = vld [vmem:[%s1 + $0x4b0] sm:$0xff]
  %v177 = vld [vmem:[%s1 + $0x4b8] sm:$0xff]
  %v178 = vld [vmem:[%s1 + $0x4c0] sm:$0xff]
  %v179 = vld [vmem:[%s1 + $0x4c8] sm:$0xff]
  %v180 = vld [vmem:[%s1 + $0x4d0] sm:$0xff]
  %v181 = vld [vmem:[%s1 + $0x4d8] sm:$0xff]
  %v182 = vld [vmem:[%s1 + $0x4e0] sm:$0xff]
  %v183 = vld [vmem:[%s1 + $0x4e8] sm:$0xff]
  %v184 = vld [vmem:[%s1 + $0x4f0] sm:$0xff]
  %v185 = vld [vmem:[%s1 + $0x4f8] sm:$0xff]
  %v186 = vld [vmem:[%s1 + $0x500] sm:$0xff]
  %v187 = vld [vmem:[%s1 + $0x508] sm:$0xff]
  %v188 = vld [vmem:[%s1 + $0x510] sm:$0xff]
  %v189 = vld [vmem:[%s1 + $0x518] sm:$0xff]
  %v190 = vld [vmem:[%s1 + $0x520] sm:$0xff]
  %v191 = vld [vmem:[%s1 + $0x528] sm:$0xff]
  %v192 = vld [vmem:[%s1 + $0x530] sm:$0xff]
  %v193 = vld [vmem:[%s1 + $0x538] sm:$0xff]
  %v194 = vld [vmem:[%s1 + $0x540] sm:$0xff]
  %v195 = vld [vmem:[%s1 + $0x548] sm:$0xff]
  %v196 = vld [vmem:[%s1 + $0x550] sm:$0xff]
  %v197 = vld [vmem:[%s1 + $0x558] sm:$0xff]
  %v198 = vld [vmem:[%s1 + $0x560] sm:$0xff]
  %v199 = vld [vmem:[%s1 + $0x568] sm:$0xff]
  %v200 = vld [vmem:[%s1 + $0x570] sm:$0xff]
  %v201 = vld [vmem:[%s1 + $0x578] sm:$0xff]
  %v202 = vld [vmem:[%s1 + $0x580] sm:$0xff]
  %v203 = vld [vmem:[%s1 + $0x588] sm:$0xff]
  %v204 = vld [vmem:[%s1 + $0x590] sm:$0xff]
  %v205 = vld [vmem:[%s1 + $0x598] sm:$0xff]
  %v206 = vld [vmem:[%s1 + $0x5a0] sm:$0xff]
  %v207 = vld [vmem:[%s1 + $0x5a8] sm:$0xff]
  %v208 = vld [vmem:[%s1 + $0x5b0] sm:$0xff]
  %v209 = vld [vmem:[%s1 + $0x5b8] sm:$0xff]
  %v210 = vld [vmem:[%s1 + $0x5c0] sm:$0xff]
  %v211 = vld [vmem:[%s1 + $0x5c8] sm:$0xff]
  %v212 = vld [vmem:[%s1 + $0x5d0] sm:$0xff]
  %v213 = vld [vmem:[%s1 + $0x5d8] sm:$0xff]
  %v214 = vld [vmem:[%s1 + $0x5e0] sm:$0xff]
  %v215 = vld [vmem:[%s1 + $0x5e8] sm:$0xff]
  %v216 = vld [vmem:[%s1 + $0x5f0] sm:$0xff]
  %v217 = vld [vmem:[%s1 + $0x5f8] sm:$0xff]
  %v218 = vld [vmem:[%s1 + $0x600] sm:$0xff]
  %v219 = vld [vmem:[%s1 + $0x608] sm:$0xff]
  %v220 = vld [vmem:[%s1 + $0x610] sm:$0xff]
  %v221 = vld [vmem:[%s1 + $0x618] sm:$0xff]
  %v222 = vld [vmem:[%s1 + $0x620] sm:$0xff]
  %v223 = vld [vmem:[%s1 + $0x628] sm:$0xff]
  %v224 = vld [vmem:[%s1 + $0x630] sm:$0xff]
  %v225 = vld [vmem:[%s1 + $0x638] sm:$0xff]
  %v226 = vld [vmem:[%s1 + $0x640] sm:$0xff]
  %v227 = vld [vmem:[%s1 + $0x648] sm:$0xff]
  %v228 = vld [vmem:[%s1 + $0x650] sm:$0xff]
  %v229 = vld [vmem:[%s1 + $0x658] sm:$0xff]
  %v230 = vld [vmem:[%s1 + $0x660] sm:$0xff]
  %v231 = vld [vmem:[%s1 + $0x668] sm:$0xff]
  %v232 = vld [vmem:[%s1 + $0x670] sm:$0xff]
  %v233 = vld [vmem:[%s1 + $0x678] sm:$0xff]
  %v234 = vld [vmem:[%s1 + $0x680] sm:$0xff]
  %v235 = vld [vmem:[%s1 + $0x688] sm:$0xff]
  %v236 = vld [vmem:[%s1 + $0x690] sm:$0xff]
  %v237 = vld [vmem:[%s1 + $0x698] sm:$0xff]
  %v238 = vld [vmem:[%s1 + $0x6a0] sm:$0xff]
  %v239 = vld [vmem:[%s1 + $0x6a8] sm:$0xff]
  %v240 = vld [vmem:[%s1 + $0x6b0] sm:$0xff]
  %v241 = vld [vmem:[%s1 + $0x6b8] sm:$0xff]
  %v242 = vld [vmem:[%s1 + $0x6c0] sm:$0xff]
  %v243 = vld [vmem:[%s1 + $0x6c8] sm:$0xff]
  %v244 = vld [vmem:[%s1 + $0x6d0] sm:$0xff]
  %v245 = vld [vmem:[%s1 + $0x6d8] sm:$0xff]
  %v246 = vld [vmem:[%s1 + $0x6e0] sm:$0xff]
  %v247 = vld [vmem:[%s1 + $0x6e8] sm:$0xff]
  %v248 = vld [vmem:[%s1 + $0x6f0] sm:$0xff]
  %v249 = vld [vmem:[%s1 + $0x6f8] sm:$0xff]
  %v250 = vld [vmem:[%s1 + $0x700] sm:$0xff]
  %v251 = vld [vmem:[%s1 + $0x708] sm:$0xff]
  %v252 = vld [vmem:[%s1 + $0x710] sm:$0xff]
  %v253 = vld [vmem:[%s1 + $0x718] sm:$0xff]
  %v254 = vld [vmem:[%s1 + $0x720] sm:$0xff]
  %v255 = vld [vmem:[%s1 + $0x728] sm:$0xff]
  %v256 = vld [vmem:[%s1 + $0x730] sm:$0xff]
  %v257 = vld [vmem:[%s1 + $0x738] sm:$0xff]
  %v258 = vld [vmem:[%s1 + $0x740] sm:$0xff]
  %v259 = vld [vmem:[%s1 + $0x748] sm:$0xff]
  %v260 = vld [vmem:[%s1 + $0x750] sm:$0xff]
  %v261 = vld [vmem:[%s1 + $0x758] sm:$0xff]
  %v262 = vld [vmem:[%s1 + $0x760] sm:$0xff]
  %v263 = vld [vmem:[%s1 + $0x768] sm:$0xff]
  %v264 = vld [vmem:[%s1 + $0x770] sm:$0xff]
  %v265 = vld [vmem:[%s1 + $0x778] sm:$0xff]
  %v266 = vld [vmem:[%s1 + $0x780] sm:$0xff]
  %v267 = vld [vmem:[%s1 + $0x788] sm:$0xff]
  %v268 = vld [vmem:[%s1 + $0x790] sm:$0xff]
  %v269 = vld [vmem:[%s1 + $0x798] sm:$0xff]
  %v270 = vld [vmem:[%s1 + $0x7a0] sm:$0xff]
  %v271 = vld [vmem:[%s1 + $0x7a8] sm:$0xff]
  %v272 = vld [vmem:[%s1 + $0x7b0] sm:$0xff]
  %v273 = vld [vmem:[%s1 + $0x7b8] sm:$0xff]
  %v274 = vld [vmem:[%s1 + $0x7c0] sm:$0xff]
  %v275 = vld [vmem:[%s1 + $0x7c8] sm:$0xff]
  %v276 = vld [vmem:[%s1 + $0x7d0] sm:$0xff]
  %v277 = vld [vmem:[%s1 + $0x7d8] sm:$0xff]
  %v278 = vld [vmem:[%s1 + $0x7e0] sm:$0xff]
  %v279 = vld [vmem:[%s1 + $0x7e8] sm:$0xff]
  %v280 = vld [vmem:[%s1 + $0x7f0] sm:$0xff]
  %v281 = vld [vmem:[%s1 + $0x7f8] sm:$0xff]
  %v282 = vld [vmem:[%s1 + $0x800] sm:$0xff]
  %v283 = vld [vmem:[%s1 + $0x808] sm:$0xff]
  %v284 = vld [vmem:[%s1 + $0x810] sm:$0xff]
  %v285 = vld [vmem:[%s1 + $0x818] sm:$0xff]
  %v286 = vld [vmem:[%s1 + $0x820] sm:$0xff]
  %v287 = vld [vmem:[%s1 + $0x828] sm:$0xff]
  %v288 = vld [vmem:[%s1 + $0x830] sm:$0xff]
  %v289 = vld [vmem:[%s1 + $0x838] sm:$0xff]
  %v290 = vld [vmem:[%s1 + $0x840] sm:$0xff]
  %v291 = vld [vmem:[%s1 + $0x848] sm:$0xff]
  %v292 = vld [vmem:[%s1 + $0x850] sm:$0xff]
  %v293 = vld [vmem:[%s1 + $0x858] sm:$0xff]
  %v294 = vld [vmem:[%s1 + $0x860] sm:$0xff]
  %v295 = vld [vmem:[%s1 + $0x868] sm:$0xff]
  %v296 = vld [vmem:[%s1 + $0x870] sm:$0xff]
  %v297 = vld [vmem:[%s1 + $0x878] sm:$0xff]
  %v298 = vld [vmem:[%s1 + $0x880] sm:$0xff]
  %v299 = vld [vmem:[%s1 + $0x888] sm:$0xff]
  %v300 = vld [vmem:[%s1 + $0x890] sm:$0xff]
  %v301 = vld [vmem:[%s1 + $0x898] sm:$0xff]
  %v302 = vld [vmem:[%s1 + $0x8a0] sm:$0xff]
  %v303 = vld [vmem:[%s1 + $0x8a8] sm:$0xff]
  %v304 = vld [vmem:[%s1 + $0x8b0] sm:$0xff]
  %v305 = vld [vmem:[%s1 + $0x8b8] sm:$0xff]
  %v306 = vld [vmem:[%s1 + $0x8c0] sm:$0xff]
  %v307 = vld [vmem:[%s1 + $0x8c8] sm:$0xff]
  %v308 = vld [vmem:[%s1 + $0x8d0] sm:$0xff]
  %v309 = vld [vmem:[%s1 + $0x8d8] sm:$0xff]
  %v310 = vld [vmem:[%s1 + $0x8e0] sm:$0xff]
  %v311 = vld [vmem:[%s1 + $0x8e8] sm:$0xff]
  %v312 = vld [vmem:[%s1 + $0x8f0] sm:$0xff]
  %v313 = vld [vmem:[%s1 + $0x8f8] sm:$0xff]
  %v314 = vld [vmem:[%s1 + $0x900] sm:$0xff]
  %v315 = vld [vmem:[%s1 + $0x908] sm:$0xff]
  %v316 = vld [vmem:[%s1 + $0x910] sm:$0xff]
  %v317 = vld [vmem:[%s1 + $0x918] sm:$0xff]
  %v318 = vld [vmem:[%s1 + $0x920] sm:$0xff]
  %v319 = vld [vmem:[%s1 + $0x928] sm:$0xff]
  %v320 = vld [vmem:[%s1 + $0x930] sm:$0xff]
  %v321 = vld [vmem:[%s1 + $0x938] sm:$0xff]
  %v322 = vld [vmem:[%s1 + $0x940] sm:$0xff]
  %v323 = vld [vmem:[%s1 + $0x948] sm:$0xff]
  %v324 = vld [vmem:[%s1 + $0x950] sm:$0xff]
  %v325 = vld [vmem:[%s1 + $0x958] sm:$0xff]
  %v326 = vld [vmem:[%s1 + $0x960] sm:$0xff]
  %v327 = vld [vmem:[%s1 + $0x968] sm:$0xff]
  %v328 = vld [vmem:[%s1 + $0x970] sm:$0xff]
  %v329 = vld [vmem:[%s1 + $0x978] sm:$0xff]
  %v330 = vld [vmem:[%s1 + $0x980] sm:$0xff]
  %v331 = vld [vmem:[%s1 + $0x988] sm:$0xff]
  %v332 = vld [vmem:[%s1 + $0x990] sm:$0xff]
  %v333 = vld [vmem:[%s1 + $0x998] sm:$0xff]
  %v334 = vld [vmem:[%s1 + $0x9a0] sm:$0xff]
  %v335 = vld [vmem:[%s1 + $0x9a8] sm:$0xff]
  %v336 = vld [vmem:[%s1 + $0x9b0] sm:$0xff]
  %v337 = vld [vmem:[%s1 + $0x9b8] sm:$0xff]
  %v338 = vld [vmem:[%s1 + $0x9c0] sm:$0xff]
  %v339 = vld [vmem:[%s1 + $0x9c8] sm:$0xff]
  %v340 = vld [vmem:[%s1 + $0x9d0] sm:$0xff]
  %v341 = vld [vmem:[%s1 + $0x9d8] sm:$0xff]
  %v342 = vld [vmem:[%s1 + $0x9e0] sm:$0xff]
  %v343 = vld [vmem:[%s1 + $0x9e8] sm:$0xff]
  %v344 = vld [vmem:[%s1 + $0x9f0] sm:$0xff]
  %v345 = vld [vmem:[%s1 + $0x9f8] sm:$0xff]
  %v346 = vld [vmem:[%s1 + $0xa00] sm:$0xff]
  %v347 = vld [vmem:[%s1 + $0xa08] sm:$0xff]
  %v348 = vld [vmem:[%s1 + $0xa10] sm:$0xff]
  %v349 = vld [vmem:[%s1 + $0xa18] sm:$0xff]
  %v350 = vld [vmem:[%s1 + $0xa20] sm:$0xff]
  %v351 = vld [vmem:[%s1 + $0xa28] sm:$0xff]
  %v352 = vld [vmem:[%s1 + $0xa30] sm:$0xff]
  %v353 = vld [vmem:[%s1 + $0xa38] sm:$0xff]
  %v354 = vld [vmem:[%s1 + $0xa40] sm:$0xff]
  %v355 = vld [vmem:[%s1 + $0xa48] sm:$0xff]
  %v356 = vld [vmem:[%s1 + $0xa50] sm:$0xff]
  %v357 = vld [vmem:[%s1 + $0xa58] sm:$0xff]
  %v358 = vld [vmem:[%s1 + $0xa60] sm:$0xff]
  %v359 = vld [vmem:[%s1 + $0xa68] sm:$0xff]
  %v360 = vld [vmem:[%s1 + $0xa70] sm:$0xff]
  %v361 = vld [vmem:[%s1 + $0xa78] sm:$0xff]
  %v362 = vld [vmem:[%s1 + $0xa80] sm:$0xff]
  %v363 = vld [vmem:[%s1 + $0xa88] sm:$0xff]
  %v364 = vld [vmem:[%s1 + $0xa90] sm:$0xff]
  %v365 = vld [vmem:[%s1 + $0xa98] sm:$0xff]
  %v366 = vld [vmem:[%s1 + $0xaa0] sm:$0xff]
  %v367 = vld [vmem:[%s1 + $0xaa8] sm:$0xff]
  %v368 = vld [vmem:[%s1 + $0xab0] sm:$0xff]
  %v369 = vld [vmem:[%s1 + $0xab8] sm:$0xff]
  %v370 = vld [vmem:[%s1 + $0xac0] sm:$0xff]
  %v371 = vld [vmem:[%s1 + $0xac8] sm:$0xff]
  %v372 = vld [vmem:[%s1 + $0xad0] sm:$0xff]
  %v373 = vld [vmem:[%s1 + $0xad8] sm:$0xff]
  %v374 = vld [vmem:[%s1 + $0xae0] sm:$0xff]
  %v375 = vld [vmem:[%s1 + $0xae8] sm:$0xff]
  %v376 = vld [vmem:[%s1 + $0xaf0] sm:$0xff]
  %v377 = vld [vmem:[%s1 + $0xaf8] sm:$0xff]
  %v378 = vld [vmem:[%s1 + $0xb00] sm:$0xff]
  %v379 = vld [vmem:[%s1 + $0xb08] sm:$0xff]
  %v380 = vld [vmem:[%s1 + $0xb10] sm:$0xff]
  %v381 = vld [vmem:[%s1 + $0xb18] sm:$0xff]
  %v382 = vld [vmem:[%s1 + $0xb20] sm:$0xff]
  %v383 = vld [vmem:[%s1 + $0xb28] sm:$0xff]
  %v384 = vld [vmem:[%s1 + $0xb30] sm:$0xff]
  %v385 = vld [vmem:[%s1 + $0xb38] sm:$0xff]
  %v386 = vld [vmem:[%s1 + $0xb40] sm:$0xff]
  %v387 = vld [vmem:[%s1 + $0xb48] sm:$0xff]
  %v388 = vld [vmem:[%s1 + $0xb50] sm:$0xff]
  %v389 = vld [vmem:[%s1 + $0xb58] sm:$0xff]
  %v390 = vld [vmem:[%s1 + $0xb60] sm:$0xff]
  %v391 = vld [vmem:[%s1 + $0xb68] sm:$0xff]
  %v392 = vld [vmem:[%s1 + $0xb70] sm:$0xff]
  %v393 = vld [vmem:[%s1 + $0xb78] sm:$0xff]
  %v394 = vld [vmem:[%s1 + $0xb80] sm:$0xff]
  %v395 = vld [vmem:[%s1 + $0xb88] sm:$0xff]
  %v396 = vld [vmem:[%s1 + $0xb90] sm:$0xff]
  %v397 = vld [vmem:[%s1 + $0xb98] sm:$0xff]
  %v398 = vld [vmem:[%s1 + $0xba0] sm:$0xff]
  %v399 = vld [vmem:[%s1 + $0xba8] sm:$0xff]
  %v400 = vld [vmem:[%s1 + $0xbb0] sm:$0xff]
  %v401 = vld [vmem:[%s1 + $0xbb8] sm:$0xff]
  %v402 = vld [vmem:[%s1 + $0xbc0] sm:$0xff]
  %v403 = vld [vmem:[%s1 + $0xbc8] sm:$0xff]
  %v404 = vld [vmem:[%s1 + $0xbd0] sm:$0xff]
  %v405 = vld [vmem:[%s1 + $0xbd8] sm:$0xff]
  %v406 = vld [vmem:[%s1 + $0xbe0] sm:$0xff]
  %v407 = vld [vmem:[%s1 + $0xbe8] sm:$0xff]
  %v408 = vld [vmem:[%s1 + $0xbf0] sm:$0xff]
  %v409 = vld [vmem:[%s1 + $0xbf8] sm:$0xff]
  %v410 = vld [vmem:[%s2] sm:$0xff]
  %v412 = vlaneseq
  %v413 = vshrl.u32 %v412, 7
  %v414 = vsub.s32 0, %v413
  %v415 = vrot.slane %v410, %v414
  %v416 = vlaneseq
  %v417 = vshrl.u32 %v416, 7
  %v418 = vsub.s32 1, %v417
  %v419 = vrot.slane %v410, %v418
  %v420 = vlaneseq
  %v421 = vshrl.u32 %v420, 7
  %v422 = vsub.s32 2, %v421
  %v423 = vrot.slane %v410, %v422
  %v424 = vlaneseq
  %v425 = vshrl.u32 %v424, 7
  %v426 = vsub.s32 3, %v425
  %v427 = vrot.slane %v410, %v426
  %v428 = vlaneseq
  %v429 = vshrl.u32 %v428, 7
  %v430 = vsub.s32 4, %v429
  %v431 = vrot.slane %v410, %v430
  %v432 = vlaneseq
  %v433 = vshrl.u32 %v432, 7
  %v434 = vsub.s32 5, %v433
  %v435 = vrot.slane %v410, %v434
  %v436 = vlaneseq
  %v437 = vshrl.u32 %v436, 7
  %v438 = vsub.s32 6, %v437
  %v439 = vrot.slane %v410, %v438
  %v440 = vlaneseq
  %v441 = vshrl.u32 %v440, 7
  %v442 = vsub.s32 7, %v441
  %v443 = vrot.slane %v410, %v442
  %v458 = vunpack.c.l.b16 %v20
  %v459 = vunpack.c.h.b16 %v20
  %v460 = vunpack.c.l.b16 %v21
  %v461 = vunpack.c.h.b16 %v21
  %v462 = vunpack.c.l.b16 %v22
  %v463 = vunpack.c.h.b16 %v22
  %v464 = vunpack.c.l.b16 %v23
  %v465 = vunpack.c.h.b16 %v23
  %v466 = vunpack.c.l.b16 %v24
  %v467 = vunpack.c.h.b16 %v24
  %v468 = vunpack.c.l.b16 %v25
  %v469 = vunpack.c.h.b16 %v25
  %v470 = vpack.c.b16 %v464, %v458
  %v471 = vpack.c.b16 %v465, %v459
  %v472 = vpack.c.b16 %v466, %v460
  %v473 = vpack.c.b16 %v467, %v461
  %v474 = vpack.c.b16 %v468, %v462
  %v475 = vpack.c.b16 %v469, %v463
  %v866 = vunpack.c.l.b16 %v26
  %v867 = vunpack.c.h.b16 %v26
  %v868 = vunpack.c.l.b16 %v27
  %v869 = vunpack.c.h.b16 %v27
  %v870 = vunpack.c.l.b16 %v28
  %v871 = vunpack.c.h.b16 %v28
  %v872 = vunpack.c.l.b16 %v29
  %v873 = vunpack.c.h.b16 %v29
  %v874 = vunpack.c.l.b16 %v30
  %v875 = vunpack.c.h.b16 %v30
  %v876 = vunpack.c.l.b16 %v31
  %v877 = vunpack.c.h.b16 %v31
  %v878 = vunpack.c.l.b16 %v32
  %v879 = vunpack.c.h.b16 %v32
  %v880 = vunpack.c.l.b16 %v33
  %v881 = vunpack.c.h.b16 %v33
  %v882 = vunpack.c.l.b16 %v34
  %v883 = vunpack.c.h.b16 %v34
  %v884 = vunpack.c.l.b16 %v35
  %v885 = vunpack.c.h.b16 %v35
  %v886 = vunpack.c.l.b16 %v36
  %v887 = vunpack.c.h.b16 %v36
  %v888 = vunpack.c.l.b16 %v37
  %v889 = vunpack.c.h.b16 %v37
  %v890 = vunpack.c.l.b16 %v38
  %v891 = vunpack.c.h.b16 %v38
  %v892 = vunpack.c.l.b16 %v39
  %v893 = vunpack.c.h.b16 %v39
  %v894 = vunpack.c.l.b16 %v40
  %v895 = vunpack.c.h.b16 %v40
  %v896 = vunpack.c.l.b16 %v41
  %v897 = vunpack.c.h.b16 %v41
  %v898 = vunpack.c.l.b16 %v42
  %v899 = vunpack.c.h.b16 %v42
  %v900 = vunpack.c.l.b16 %v43
  %v901 = vunpack.c.h.b16 %v43
  %v902 = vunpack.c.l.b16 %v44
  %v903 = vunpack.c.h.b16 %v44
  %v904 = vunpack.c.l.b16 %v45
  %v905 = vunpack.c.h.b16 %v45
  %v906 = vunpack.c.l.b16 %v46
  %v907 = vunpack.c.h.b16 %v46
  %v908 = vunpack.c.l.b16 %v47
  %v909 = vunpack.c.h.b16 %v47
  %v910 = vunpack.c.l.b16 %v48
  %v911 = vunpack.c.h.b16 %v48
  %v912 = vunpack.c.l.b16 %v49
  %v913 = vunpack.c.h.b16 %v49
  %v914 = vunpack.c.l.b16 %v50
  %v915 = vunpack.c.h.b16 %v50
  %v916 = vunpack.c.l.b16 %v51
  %v917 = vunpack.c.h.b16 %v51
  %v918 = vunpack.c.l.b16 %v52
  %v919 = vunpack.c.h.b16 %v52
  %v920 = vunpack.c.l.b16 %v53
  %v921 = vunpack.c.h.b16 %v53
  %v922 = vunpack.c.l.b16 %v54
  %v923 = vunpack.c.h.b16 %v54
  %v924 = vunpack.c.l.b16 %v55
  %v925 = vunpack.c.h.b16 %v55
  %v926 = vunpack.c.l.b16 %v56
  %v927 = vunpack.c.h.b16 %v56
  %v928 = vunpack.c.l.b16 %v57
  %v929 = vunpack.c.h.b16 %v57
  %v930 = vunpack.c.l.b16 %v58
  %v931 = vunpack.c.h.b16 %v58
  %v932 = vunpack.c.l.b16 %v59
  %v933 = vunpack.c.h.b16 %v59
  %v934 = vunpack.c.l.b16 %v60
  %v935 = vunpack.c.h.b16 %v60
  %v936 = vunpack.c.l.b16 %v61
  %v937 = vunpack.c.h.b16 %v61
  %v938 = vunpack.c.l.b16 %v62
  %v939 = vunpack.c.h.b16 %v62
  %v940 = vunpack.c.l.b16 %v63
  %v941 = vunpack.c.h.b16 %v63
  %v942 = vunpack.c.l.b16 %v64
  %v943 = vunpack.c.h.b16 %v64
  %v944 = vunpack.c.l.b16 %v65
  %v945 = vunpack.c.h.b16 %v65
  %v946 = vunpack.c.l.b16 %v66
  %v947 = vunpack.c.h.b16 %v66
  %v948 = vunpack.c.l.b16 %v67
  %v949 = vunpack.c.h.b16 %v67
  %v950 = vunpack.c.l.b16 %v68
  %v951 = vunpack.c.h.b16 %v68
  %v952 = vunpack.c.l.b16 %v69
  %v953 = vunpack.c.h.b16 %v69
  %v954 = vunpack.c.l.b16 %v70
  %v955 = vunpack.c.h.b16 %v70
  %v956 = vunpack.c.l.b16 %v71
  %v957 = vunpack.c.h.b16 %v71
  %v958 = vunpack.c.l.b16 %v72
  %v959 = vunpack.c.h.b16 %v72
  %v960 = vunpack.c.l.b16 %v73
  %v961 = vunpack.c.h.b16 %v73
  %v962 = vunpack.c.l.b16 %v74
  %v963 = vunpack.c.h.b16 %v74
  %v964 = vunpack.c.l.b16 %v75
  %v965 = vunpack.c.h.b16 %v75
  %v966 = vunpack.c.l.b16 %v76
  %v967 = vunpack.c.h.b16 %v76
  %v968 = vunpack.c.l.b16 %v77
  %v969 = vunpack.c.h.b16 %v77
  %v970 = vunpack.c.l.b16 %v78
  %v971 = vunpack.c.h.b16 %v78
  %v972 = vunpack.c.l.b16 %v79
  %v973 = vunpack.c.h.b16 %v79
  %v974 = vunpack.c.l.b16 %v80
  %v975 = vunpack.c.h.b16 %v80
  %v976 = vunpack.c.l.b16 %v81
  %v977 = vunpack.c.h.b16 %v81
  %v978 = vunpack.c.l.b16 %v82
  %v979 = vunpack.c.h.b16 %v82
  %v980 = vunpack.c.l.b16 %v83
  %v981 = vunpack.c.h.b16 %v83
  %v982 = vunpack.c.l.b16 %v84
  %v983 = vunpack.c.h.b16 %v84
  %v984 = vunpack.c.l.b16 %v85
  %v985 = vunpack.c.h.b16 %v85
  %v986 = vunpack.c.l.b16 %v86
  %v987 = vunpack.c.h.b16 %v86
  %v988 = vunpack.c.l.b16 %v87
  %v989 = vunpack.c.h.b16 %v87
  %v990 = vunpack.c.l.b16 %v88
  %v991 = vunpack.c.h.b16 %v88
  %v992 = vunpack.c.l.b16 %v89
  %v993 = vunpack.c.h.b16 %v89
  %v994 = vunpack.c.l.b16 %v90
  %v995 = vunpack.c.h.b16 %v90
  %v996 = vunpack.c.l.b16 %v91
  %v997 = vunpack.c.h.b16 %v91
  %v998 = vunpack.c.l.b16 %v92
  %v999 = vunpack.c.h.b16 %v92
  %v1000 = vunpack.c.l.b16 %v93
  %v1001 = vunpack.c.h.b16 %v93
  %v1002 = vunpack.c.l.b16 %v94
  %v1003 = vunpack.c.h.b16 %v94
  %v1004 = vunpack.c.l.b16 %v95
  %v1005 = vunpack.c.h.b16 %v95
  %v1006 = vunpack.c.l.b16 %v96
  %v1007 = vunpack.c.h.b16 %v96
  %v1008 = vunpack.c.l.b16 %v97
  %v1009 = vunpack.c.h.b16 %v97
  %v1010 = vunpack.c.l.b16 %v98
  %v1011 = vunpack.c.h.b16 %v98
  %v1012 = vunpack.c.l.b16 %v99
  %v1013 = vunpack.c.h.b16 %v99
  %v1014 = vunpack.c.l.b16 %v100
  %v1015 = vunpack.c.h.b16 %v100
  %v1016 = vunpack.c.l.b16 %v101
  %v1017 = vunpack.c.h.b16 %v101
  %v1018 = vunpack.c.l.b16 %v102
  %v1019 = vunpack.c.h.b16 %v102
  %v1020 = vunpack.c.l.b16 %v103
  %v1021 = vunpack.c.h.b16 %v103
  %v1022 = vunpack.c.l.b16 %v104
  %v1023 = vunpack.c.h.b16 %v104
  %v1024 = vunpack.c.l.b16 %v105
  %v1025 = vunpack.c.h.b16 %v105
  %v1026 = vunpack.c.l.b16 %v106
  %v1027 = vunpack.c.h.b16 %v106
  %v1028 = vunpack.c.l.b16 %v107
  %v1029 = vunpack.c.h.b16 %v107
  %v1030 = vunpack.c.l.b16 %v108
  %v1031 = vunpack.c.h.b16 %v108
  %v1032 = vunpack.c.l.b16 %v109
  %v1033 = vunpack.c.h.b16 %v109
  %v1034 = vunpack.c.l.b16 %v110
  %v1035 = vunpack.c.h.b16 %v110
  %v1036 = vunpack.c.l.b16 %v111
  %v1037 = vunpack.c.h.b16 %v111
  %v1038 = vunpack.c.l.b16 %v112
  %v1039 = vunpack.c.h.b16 %v112
  %v1040 = vunpack.c.l.b16 %v113
  %v1041 = vunpack.c.h.b16 %v113
  %v1042 = vunpack.c.l.b16 %v114
  %v1043 = vunpack.c.h.b16 %v114
  %v1044 = vunpack.c.l.b16 %v115
  %v1045 = vunpack.c.h.b16 %v115
  %v1046 = vunpack.c.l.b16 %v116
  %v1047 = vunpack.c.h.b16 %v116
  %v1048 = vunpack.c.l.b16 %v117
  %v1049 = vunpack.c.h.b16 %v117
  %v1050 = vunpack.c.l.b16 %v118
  %v1051 = vunpack.c.h.b16 %v118
  %v1052 = vunpack.c.l.b16 %v119
  %v1053 = vunpack.c.h.b16 %v119
  %v1054 = vunpack.c.l.b16 %v120
  %v1055 = vunpack.c.h.b16 %v120
  %v1056 = vunpack.c.l.b16 %v121
  %v1057 = vunpack.c.h.b16 %v121
  %v1058 = vunpack.c.l.b16 %v122
  %v1059 = vunpack.c.h.b16 %v122
  %v1060 = vunpack.c.l.b16 %v123
  %v1061 = vunpack.c.h.b16 %v123
  %v1062 = vunpack.c.l.b16 %v124
  %v1063 = vunpack.c.h.b16 %v124
  %v1064 = vunpack.c.l.b16 %v125
  %v1065 = vunpack.c.h.b16 %v125
  %v1066 = vunpack.c.l.b16 %v126
  %v1067 = vunpack.c.h.b16 %v126
  %v1068 = vunpack.c.l.b16 %v127
  %v1069 = vunpack.c.h.b16 %v127
  %v1070 = vunpack.c.l.b16 %v128
  %v1071 = vunpack.c.h.b16 %v128
  %v1072 = vunpack.c.l.b16 %v129
  %v1073 = vunpack.c.h.b16 %v129
  %v1074 = vunpack.c.l.b16 %v130
  %v1075 = vunpack.c.h.b16 %v130
  %v1076 = vunpack.c.l.b16 %v131
  %v1077 = vunpack.c.h.b16 %v131
  %v1078 = vunpack.c.l.b16 %v132
  %v1079 = vunpack.c.h.b16 %v132
  %v1080 = vunpack.c.l.b16 %v133
  %v1081 = vunpack.c.h.b16 %v133
  %v1082 = vunpack.c.l.b16 %v134
  %v1083 = vunpack.c.h.b16 %v134
  %v1084 = vunpack.c.l.b16 %v135
  %v1085 = vunpack.c.h.b16 %v135
  %v1086 = vunpack.c.l.b16 %v136
  %v1087 = vunpack.c.h.b16 %v136
  %v1088 = vunpack.c.l.b16 %v137
  %v1089 = vunpack.c.h.b16 %v137
  %v1090 = vunpack.c.l.b16 %v138
  %v1091 = vunpack.c.h.b16 %v138
  %v1092 = vunpack.c.l.b16 %v139
  %v1093 = vunpack.c.h.b16 %v139
  %v1094 = vunpack.c.l.b16 %v140
  %v1095 = vunpack.c.h.b16 %v140
  %v1096 = vunpack.c.l.b16 %v141
  %v1097 = vunpack.c.h.b16 %v141
  %v1098 = vunpack.c.l.b16 %v142
  %v1099 = vunpack.c.h.b16 %v142
  %v1100 = vunpack.c.l.b16 %v143
  %v1101 = vunpack.c.h.b16 %v143
  %v1102 = vunpack.c.l.b16 %v144
  %v1103 = vunpack.c.h.b16 %v144
  %v1104 = vunpack.c.l.b16 %v145
  %v1105 = vunpack.c.h.b16 %v145
  %v1106 = vunpack.c.l.b16 %v146
  %v1107 = vunpack.c.h.b16 %v146
  %v1108 = vunpack.c.l.b16 %v147
  %v1109 = vunpack.c.h.b16 %v147
  %v1110 = vunpack.c.l.b16 %v148
  %v1111 = vunpack.c.h.b16 %v148
  %v1112 = vunpack.c.l.b16 %v149
  %v1113 = vunpack.c.h.b16 %v149
  %v1114 = vunpack.c.l.b16 %v150
  %v1115 = vunpack.c.h.b16 %v150
  %v1116 = vunpack.c.l.b16 %v151
  %v1117 = vunpack.c.h.b16 %v151
  %v1118 = vunpack.c.l.b16 %v152
  %v1119 = vunpack.c.h.b16 %v152
  %v1120 = vunpack.c.l.b16 %v153
  %v1121 = vunpack.c.h.b16 %v153
  %v1122 = vunpack.c.l.b16 %v154
  %v1123 = vunpack.c.h.b16 %v154
  %v1124 = vunpack.c.l.b16 %v155
  %v1125 = vunpack.c.h.b16 %v155
  %v1126 = vunpack.c.l.b16 %v156
  %v1127 = vunpack.c.h.b16 %v156
  %v1128 = vunpack.c.l.b16 %v157
  %v1129 = vunpack.c.h.b16 %v157
  %v1130 = vunpack.c.l.b16 %v158
  %v1131 = vunpack.c.h.b16 %v158
  %v1132 = vunpack.c.l.b16 %v159
  %v1133 = vunpack.c.h.b16 %v159
  %v1134 = vunpack.c.l.b16 %v160
  %v1135 = vunpack.c.h.b16 %v160
  %v1136 = vunpack.c.l.b16 %v161
  %v1137 = vunpack.c.h.b16 %v161
  %v1138 = vunpack.c.l.b16 %v162
  %v1139 = vunpack.c.h.b16 %v162
  %v1140 = vunpack.c.l.b16 %v163
  %v1141 = vunpack.c.h.b16 %v163
  %v1142 = vunpack.c.l.b16 %v164
  %v1143 = vunpack.c.h.b16 %v164
  %v1144 = vunpack.c.l.b16 %v165
  %v1145 = vunpack.c.h.b16 %v165
  %v1146 = vunpack.c.l.b16 %v166
  %v1147 = vunpack.c.h.b16 %v166
  %v1148 = vunpack.c.l.b16 %v167
  %v1149 = vunpack.c.h.b16 %v167
  %v1150 = vunpack.c.l.b16 %v168
  %v1151 = vunpack.c.h.b16 %v168
  %v1152 = vunpack.c.l.b16 %v169
  %v1153 = vunpack.c.h.b16 %v169
  %v1154 = vunpack.c.l.b16 %v170
  %v1155 = vunpack.c.h.b16 %v170
  %v1156 = vunpack.c.l.b16 %v171
  %v1157 = vunpack.c.h.b16 %v171
  %v1158 = vunpack.c.l.b16 %v172
  %v1159 = vunpack.c.h.b16 %v172
  %v1160 = vunpack.c.l.b16 %v173
  %v1161 = vunpack.c.h.b16 %v173
  %v1162 = vunpack.c.l.b16 %v174
  %v1163 = vunpack.c.h.b16 %v174
  %v1164 = vunpack.c.l.b16 %v175
  %v1165 = vunpack.c.h.b16 %v175
  %v1166 = vunpack.c.l.b16 %v176
  %v1167 = vunpack.c.h.b16 %v176
  %v1168 = vunpack.c.l.b16 %v177
  %v1169 = vunpack.c.h.b16 %v177
  %v1170 = vunpack.c.l.b16 %v178
  %v1171 = vunpack.c.h.b16 %v178
  %v1172 = vunpack.c.l.b16 %v179
  %v1173 = vunpack.c.h.b16 %v179
  %v1174 = vunpack.c.l.b16 %v180
  %v1175 = vunpack.c.h.b16 %v180
  %v1176 = vunpack.c.l.b16 %v181
  %v1177 = vunpack.c.h.b16 %v181
  %v1178 = vunpack.c.l.b16 %v182
  %v1179 = vunpack.c.h.b16 %v182
  %v1180 = vunpack.c.l.b16 %v183
  %v1181 = vunpack.c.h.b16 %v183
  %v1182 = vunpack.c.l.b16 %v184
  %v1183 = vunpack.c.h.b16 %v184
  %v1184 = vunpack.c.l.b16 %v185
  %v1185 = vunpack.c.h.b16 %v185
  %v1186 = vunpack.c.l.b16 %v186
  %v1187 = vunpack.c.h.b16 %v186
  %v1188 = vunpack.c.l.b16 %v187
  %v1189 = vunpack.c.h.b16 %v187
  %v1190 = vunpack.c.l.b16 %v188
  %v1191 = vunpack.c.h.b16 %v188
  %v1192 = vunpack.c.l.b16 %v189
  %v1193 = vunpack.c.h.b16 %v189
  %v1194 = vunpack.c.l.b16 %v190
  %v1195 = vunpack.c.h.b16 %v190
  %v1196 = vunpack.c.l.b16 %v191
  %v1197 = vunpack.c.h.b16 %v191
  %v1198 = vunpack.c.l.b16 %v192
  %v1199 = vunpack.c.h.b16 %v192
  %v1200 = vunpack.c.l.b16 %v193
  %v1201 = vunpack.c.h.b16 %v193
  %v1202 = vunpack.c.l.b16 %v194
  %v1203 = vunpack.c.h.b16 %v194
  %v1204 = vunpack.c.l.b16 %v195
  %v1205 = vunpack.c.h.b16 %v195
  %v1206 = vunpack.c.l.b16 %v196
  %v1207 = vunpack.c.h.b16 %v196
  %v1208 = vunpack.c.l.b16 %v197
  %v1209 = vunpack.c.h.b16 %v197
  %v1210 = vunpack.c.l.b16 %v198
  %v1211 = vunpack.c.h.b16 %v198
  %v1212 = vunpack.c.l.b16 %v199
  %v1213 = vunpack.c.h.b16 %v199
  %v1214 = vunpack.c.l.b16 %v200
  %v1215 = vunpack.c.h.b16 %v200
  %v1216 = vunpack.c.l.b16 %v201
  %v1217 = vunpack.c.h.b16 %v201
  %v1218 = vunpack.c.l.b16 %v202
  %v1219 = vunpack.c.h.b16 %v202
  %v1220 = vunpack.c.l.b16 %v203
  %v1221 = vunpack.c.h.b16 %v203
  %v1222 = vunpack.c.l.b16 %v204
  %v1223 = vunpack.c.h.b16 %v204
  %v1224 = vunpack.c.l.b16 %v205
  %v1225 = vunpack.c.h.b16 %v205
  %v1226 = vunpack.c.l.b16 %v206
  %v1227 = vunpack.c.h.b16 %v206
  %v1228 = vunpack.c.l.b16 %v207
  %v1229 = vunpack.c.h.b16 %v207
  %v1230 = vunpack.c.l.b16 %v208
  %v1231 = vunpack.c.h.b16 %v208
  %v1232 = vunpack.c.l.b16 %v209
  %v1233 = vunpack.c.h.b16 %v209
  %v1234 = vunpack.c.l.b16 %v210
  %v1235 = vunpack.c.h.b16 %v210
  %v1236 = vunpack.c.l.b16 %v211
  %v1237 = vunpack.c.h.b16 %v211
  %v1238 = vunpack.c.l.b16 %v212
  %v1239 = vunpack.c.h.b16 %v212
  %v1240 = vunpack.c.l.b16 %v213
  %v1241 = vunpack.c.h.b16 %v213
  %v1242 = vunpack.c.l.b16 %v214
  %v1243 = vunpack.c.h.b16 %v214
  %v1244 = vunpack.c.l.b16 %v215
  %v1245 = vunpack.c.h.b16 %v215
  %v1246 = vunpack.c.l.b16 %v216
  %v1247 = vunpack.c.h.b16 %v216
  %v1248 = vunpack.c.l.b16 %v217
  %v1249 = vunpack.c.h.b16 %v217
  %v1250 = vunpack.c.l.b16 %v218
  %v1251 = vunpack.c.h.b16 %v218
  %v1252 = vunpack.c.l.b16 %v219
  %v1253 = vunpack.c.h.b16 %v219
  %v1254 = vunpack.c.l.b16 %v220
  %v1255 = vunpack.c.h.b16 %v220
  %v1256 = vunpack.c.l.b16 %v221
  %v1257 = vunpack.c.h.b16 %v221
  %v1258 = vunpack.c.l.b16 %v222
  %v1259 = vunpack.c.h.b16 %v222
  %v1260 = vunpack.c.l.b16 %v223
  %v1261 = vunpack.c.h.b16 %v223
  %v1262 = vunpack.c.l.b16 %v224
  %v1263 = vunpack.c.h.b16 %v224
  %v1264 = vunpack.c.l.b16 %v225
  %v1265 = vunpack.c.h.b16 %v225
  %v1266 = vunpack.c.l.b16 %v226
  %v1267 = vunpack.c.h.b16 %v226
  %v1268 = vunpack.c.l.b16 %v227
  %v1269 = vunpack.c.h.b16 %v227
  %v1270 = vunpack.c.l.b16 %v228
  %v1271 = vunpack.c.h.b16 %v228
  %v1272 = vunpack.c.l.b16 %v229
  %v1273 = vunpack.c.h.b16 %v229
  %v1274 = vunpack.c.l.b16 %v230
  %v1275 = vunpack.c.h.b16 %v230
  %v1276 = vunpack.c.l.b16 %v231
  %v1277 = vunpack.c.h.b16 %v231
  %v1278 = vunpack.c.l.b16 %v232
  %v1279 = vunpack.c.h.b16 %v232
  %v1280 = vunpack.c.l.b16 %v233
  %v1281 = vunpack.c.h.b16 %v233
  %v1282 = vunpack.c.l.b16 %v234
  %v1283 = vunpack.c.h.b16 %v234
  %v1284 = vunpack.c.l.b16 %v235
  %v1285 = vunpack.c.h.b16 %v235
  %v1286 = vunpack.c.l.b16 %v236
  %v1287 = vunpack.c.h.b16 %v236
  %v1288 = vunpack.c.l.b16 %v237
  %v1289 = vunpack.c.h.b16 %v237
  %v1290 = vunpack.c.l.b16 %v238
  %v1291 = vunpack.c.h.b16 %v238
  %v1292 = vunpack.c.l.b16 %v239
  %v1293 = vunpack.c.h.b16 %v239
  %v1294 = vunpack.c.l.b16 %v240
  %v1295 = vunpack.c.h.b16 %v240
  %v1296 = vunpack.c.l.b16 %v241
  %v1297 = vunpack.c.h.b16 %v241
  %v1298 = vunpack.c.l.b16 %v242
  %v1299 = vunpack.c.h.b16 %v242
  %v1300 = vunpack.c.l.b16 %v243
  %v1301 = vunpack.c.h.b16 %v243
  %v1302 = vunpack.c.l.b16 %v244
  %v1303 = vunpack.c.h.b16 %v244
  %v1304 = vunpack.c.l.b16 %v245
  %v1305 = vunpack.c.h.b16 %v245
  %v1306 = vunpack.c.l.b16 %v246
  %v1307 = vunpack.c.h.b16 %v246
  %v1308 = vunpack.c.l.b16 %v247
  %v1309 = vunpack.c.h.b16 %v247
  %v1310 = vunpack.c.l.b16 %v248
  %v1311 = vunpack.c.h.b16 %v248
  %v1312 = vunpack.c.l.b16 %v249
  %v1313 = vunpack.c.h.b16 %v249
  %v1314 = vunpack.c.l.b16 %v250
  %v1315 = vunpack.c.h.b16 %v250
  %v1316 = vunpack.c.l.b16 %v251
  %v1317 = vunpack.c.h.b16 %v251
  %v1318 = vunpack.c.l.b16 %v252
  %v1319 = vunpack.c.h.b16 %v252
  %v1320 = vunpack.c.l.b16 %v253
  %v1321 = vunpack.c.h.b16 %v253
  %v1322 = vunpack.c.l.b16 %v254
  %v1323 = vunpack.c.h.b16 %v254
  %v1324 = vunpack.c.l.b16 %v255
  %v1325 = vunpack.c.h.b16 %v255
  %v1326 = vunpack.c.l.b16 %v256
  %v1327 = vunpack.c.h.b16 %v256
  %v1328 = vunpack.c.l.b16 %v257
  %v1329 = vunpack.c.h.b16 %v257
  %v1330 = vunpack.c.l.b16 %v258
  %v1331 = vunpack.c.h.b16 %v258
  %v1332 = vunpack.c.l.b16 %v259
  %v1333 = vunpack.c.h.b16 %v259
  %v1334 = vunpack.c.l.b16 %v260
  %v1335 = vunpack.c.h.b16 %v260
  %v1336 = vunpack.c.l.b16 %v261
  %v1337 = vunpack.c.h.b16 %v261
  %v1338 = vunpack.c.l.b16 %v262
  %v1339 = vunpack.c.h.b16 %v262
  %v1340 = vunpack.c.l.b16 %v263
  %v1341 = vunpack.c.h.b16 %v263
  %v1342 = vunpack.c.l.b16 %v264
  %v1343 = vunpack.c.h.b16 %v264
  %v1344 = vunpack.c.l.b16 %v265
  %v1345 = vunpack.c.h.b16 %v265
  %v1346 = vunpack.c.l.b16 %v266
  %v1347 = vunpack.c.h.b16 %v266
  %v1348 = vunpack.c.l.b16 %v267
  %v1349 = vunpack.c.h.b16 %v267
  %v1350 = vunpack.c.l.b16 %v268
  %v1351 = vunpack.c.h.b16 %v268
  %v1352 = vunpack.c.l.b16 %v269
  %v1353 = vunpack.c.h.b16 %v269
  %v1354 = vunpack.c.l.b16 %v270
  %v1355 = vunpack.c.h.b16 %v270
  %v1356 = vunpack.c.l.b16 %v271
  %v1357 = vunpack.c.h.b16 %v271
  %v1358 = vunpack.c.l.b16 %v272
  %v1359 = vunpack.c.h.b16 %v272
  %v1360 = vunpack.c.l.b16 %v273
  %v1361 = vunpack.c.h.b16 %v273
  %v1362 = vunpack.c.l.b16 %v274
  %v1363 = vunpack.c.h.b16 %v274
  %v1364 = vunpack.c.l.b16 %v275
  %v1365 = vunpack.c.h.b16 %v275
  %v1366 = vunpack.c.l.b16 %v276
  %v1367 = vunpack.c.h.b16 %v276
  %v1368 = vunpack.c.l.b16 %v277
  %v1369 = vunpack.c.h.b16 %v277
  %v1370 = vunpack.c.l.b16 %v278
  %v1371 = vunpack.c.h.b16 %v278
  %v1372 = vunpack.c.l.b16 %v279
  %v1373 = vunpack.c.h.b16 %v279
  %v1374 = vunpack.c.l.b16 %v280
  %v1375 = vunpack.c.h.b16 %v280
  %v1376 = vunpack.c.l.b16 %v281
  %v1377 = vunpack.c.h.b16 %v281
  %v1378 = vunpack.c.l.b16 %v282
  %v1379 = vunpack.c.h.b16 %v282
  %v1380 = vunpack.c.l.b16 %v283
  %v1381 = vunpack.c.h.b16 %v283
  %v1382 = vunpack.c.l.b16 %v284
  %v1383 = vunpack.c.h.b16 %v284
  %v1384 = vunpack.c.l.b16 %v285
  %v1385 = vunpack.c.h.b16 %v285
  %v1386 = vunpack.c.l.b16 %v286
  %v1387 = vunpack.c.h.b16 %v286
  %v1388 = vunpack.c.l.b16 %v287
  %v1389 = vunpack.c.h.b16 %v287
  %v1390 = vunpack.c.l.b16 %v288
  %v1391 = vunpack.c.h.b16 %v288
  %v1392 = vunpack.c.l.b16 %v289
  %v1393 = vunpack.c.h.b16 %v289
  %v1394 = vunpack.c.l.b16 %v290
  %v1395 = vunpack.c.h.b16 %v290
  %v1396 = vunpack.c.l.b16 %v291
  %v1397 = vunpack.c.h.b16 %v291
  %v1398 = vunpack.c.l.b16 %v292
  %v1399 = vunpack.c.h.b16 %v292
  %v1400 = vunpack.c.l.b16 %v293
  %v1401 = vunpack.c.h.b16 %v293
  %v1402 = vunpack.c.l.b16 %v294
  %v1403 = vunpack.c.h.b16 %v294
  %v1404 = vunpack.c.l.b16 %v295
  %v1405 = vunpack.c.h.b16 %v295
  %v1406 = vunpack.c.l.b16 %v296
  %v1407 = vunpack.c.h.b16 %v296
  %v1408 = vunpack.c.l.b16 %v297
  %v1409 = vunpack.c.h.b16 %v297
  %v1410 = vunpack.c.l.b16 %v298
  %v1411 = vunpack.c.h.b16 %v298
  %v1412 = vunpack.c.l.b16 %v299
  %v1413 = vunpack.c.h.b16 %v299
  %v1414 = vunpack.c.l.b16 %v300
  %v1415 = vunpack.c.h.b16 %v300
  %v1416 = vunpack.c.l.b16 %v301
  %v1417 = vunpack.c.h.b16 %v301
  %v1418 = vunpack.c.l.b16 %v302
  %v1419 = vunpack.c.h.b16 %v302
  %v1420 = vunpack.c.l.b16 %v303
  %v1421 = vunpack.c.h.b16 %v303
  %v1422 = vunpack.c.l.b16 %v304
  %v1423 = vunpack.c.h.b16 %v304
  %v1424 = vunpack.c.l.b16 %v305
  %v1425 = vunpack.c.h.b16 %v305
  %v1426 = vunpack.c.l.b16 %v306
  %v1427 = vunpack.c.h.b16 %v306
  %v1428 = vunpack.c.l.b16 %v307
  %v1429 = vunpack.c.h.b16 %v307
  %v1430 = vunpack.c.l.b16 %v308
  %v1431 = vunpack.c.h.b16 %v308
  %v1432 = vunpack.c.l.b16 %v309
  %v1433 = vunpack.c.h.b16 %v309
  %v1434 = vunpack.c.l.b16 %v310
  %v1435 = vunpack.c.h.b16 %v310
  %v1436 = vunpack.c.l.b16 %v311
  %v1437 = vunpack.c.h.b16 %v311
  %v1438 = vunpack.c.l.b16 %v312
  %v1439 = vunpack.c.h.b16 %v312
  %v1440 = vunpack.c.l.b16 %v313
  %v1441 = vunpack.c.h.b16 %v313
  %v1442 = vunpack.c.l.b16 %v314
  %v1443 = vunpack.c.h.b16 %v314
  %v1444 = vunpack.c.l.b16 %v315
  %v1445 = vunpack.c.h.b16 %v315
  %v1446 = vunpack.c.l.b16 %v316
  %v1447 = vunpack.c.h.b16 %v316
  %v1448 = vunpack.c.l.b16 %v317
  %v1449 = vunpack.c.h.b16 %v317
  %v1450 = vunpack.c.l.b16 %v318
  %v1451 = vunpack.c.h.b16 %v318
  %v1452 = vunpack.c.l.b16 %v319
  %v1453 = vunpack.c.h.b16 %v319
  %v1454 = vunpack.c.l.b16 %v320
  %v1455 = vunpack.c.h.b16 %v320
  %v1456 = vunpack.c.l.b16 %v321
  %v1457 = vunpack.c.h.b16 %v321
  %v1458 = vunpack.c.l.b16 %v322
  %v1459 = vunpack.c.h.b16 %v322
  %v1460 = vunpack.c.l.b16 %v323
  %v1461 = vunpack.c.h.b16 %v323
  %v1462 = vunpack.c.l.b16 %v324
  %v1463 = vunpack.c.h.b16 %v324
  %v1464 = vunpack.c.l.b16 %v325
  %v1465 = vunpack.c.h.b16 %v325
  %v1466 = vunpack.c.l.b16 %v326
  %v1467 = vunpack.c.h.b16 %v326
  %v1468 = vunpack.c.l.b16 %v327
  %v1469 = vunpack.c.h.b16 %v327
  %v1470 = vunpack.c.l.b16 %v328
  %v1471 = vunpack.c.h.b16 %v328
  %v1472 = vunpack.c.l.b16 %v329
  %v1473 = vunpack.c.h.b16 %v329
  %v1474 = vunpack.c.l.b16 %v330
  %v1475 = vunpack.c.h.b16 %v330
  %v1476 = vunpack.c.l.b16 %v331
  %v1477 = vunpack.c.h.b16 %v331
  %v1478 = vunpack.c.l.b16 %v332
  %v1479 = vunpack.c.h.b16 %v332
  %v1480 = vunpack.c.l.b16 %v333
  %v1481 = vunpack.c.h.b16 %v333
  %v1482 = vunpack.c.l.b16 %v334
  %v1483 = vunpack.c.h.b16 %v334
  %v1484 = vunpack.c.l.b16 %v335
  %v1485 = vunpack.c.h.b16 %v335
  %v1486 = vunpack.c.l.b16 %v336
  %v1487 = vunpack.c.h.b16 %v336
  %v1488 = vunpack.c.l.b16 %v337
  %v1489 = vunpack.c.h.b16 %v337
  %v1490 = vunpack.c.l.b16 %v338
  %v1491 = vunpack.c.h.b16 %v338
  %v1492 = vunpack.c.l.b16 %v339
  %v1493 = vunpack.c.h.b16 %v339
  %v1494 = vunpack.c.l.b16 %v340
  %v1495 = vunpack.c.h.b16 %v340
  %v1496 = vunpack.c.l.b16 %v341
  %v1497 = vunpack.c.h.b16 %v341
  %v1498 = vunpack.c.l.b16 %v342
  %v1499 = vunpack.c.h.b16 %v342
  %v1500 = vunpack.c.l.b16 %v343
  %v1501 = vunpack.c.h.b16 %v343
  %v1502 = vunpack.c.l.b16 %v344
  %v1503 = vunpack.c.h.b16 %v344
  %v1504 = vunpack.c.l.b16 %v345
  %v1505 = vunpack.c.h.b16 %v345
  %v1506 = vunpack.c.l.b16 %v346
  %v1507 = vunpack.c.h.b16 %v346
  %v1508 = vunpack.c.l.b16 %v347
  %v1509 = vunpack.c.h.b16 %v347
  %v1510 = vunpack.c.l.b16 %v348
  %v1511 = vunpack.c.h.b16 %v348
  %v1512 = vunpack.c.l.b16 %v349
  %v1513 = vunpack.c.h.b16 %v349
  %v1514 = vunpack.c.l.b16 %v350
  %v1515 = vunpack.c.h.b16 %v350
  %v1516 = vunpack.c.l.b16 %v351
  %v1517 = vunpack.c.h.b16 %v351
  %v1518 = vunpack.c.l.b16 %v352
  %v1519 = vunpack.c.h.b16 %v352
  %v1520 = vunpack.c.l.b16 %v353
  %v1521 = vunpack.c.h.b16 %v353
  %v1522 = vunpack.c.l.b16 %v354
  %v1523 = vunpack.c.h.b16 %v354
  %v1524 = vunpack.c.l.b16 %v355
  %v1525 = vunpack.c.h.b16 %v355
  %v1526 = vunpack.c.l.b16 %v356
  %v1527 = vunpack.c.h.b16 %v356
  %v1528 = vunpack.c.l.b16 %v357
  %v1529 = vunpack.c.h.b16 %v357
  %v1530 = vunpack.c.l.b16 %v358
  %v1531 = vunpack.c.h.b16 %v358
  %v1532 = vunpack.c.l.b16 %v359
  %v1533 = vunpack.c.h.b16 %v359
  %v1534 = vunpack.c.l.b16 %v360
  %v1535 = vunpack.c.h.b16 %v360
  %v1536 = vunpack.c.l.b16 %v361
  %v1537 = vunpack.c.h.b16 %v361
  %v1538 = vunpack.c.l.b16 %v362
  %v1539 = vunpack.c.h.b16 %v362
  %v1540 = vunpack.c.l.b16 %v363
  %v1541 = vunpack.c.h.b16 %v363
  %v1542 = vunpack.c.l.b16 %v364
  %v1543 = vunpack.c.h.b16 %v364
  %v1544 = vunpack.c.l.b16 %v365
  %v1545 = vunpack.c.h.b16 %v365
  %v1546 = vunpack.c.l.b16 %v366
  %v1547 = vunpack.c.h.b16 %v366
  %v1548 = vunpack.c.l.b16 %v367
  %v1549 = vunpack.c.h.b16 %v367
  %v1550 = vunpack.c.l.b16 %v368
  %v1551 = vunpack.c.h.b16 %v368
  %v1552 = vunpack.c.l.b16 %v369
  %v1553 = vunpack.c.h.b16 %v369
  %v1554 = vunpack.c.l.b16 %v370
  %v1555 = vunpack.c.h.b16 %v370
  %v1556 = vunpack.c.l.b16 %v371
  %v1557 = vunpack.c.h.b16 %v371
  %v1558 = vunpack.c.l.b16 %v372
  %v1559 = vunpack.c.h.b16 %v372
  %v1560 = vunpack.c.l.b16 %v373
  %v1561 = vunpack.c.h.b16 %v373
  %v1562 = vunpack.c.l.b16 %v374
  %v1563 = vunpack.c.h.b16 %v374
  %v1564 = vunpack.c.l.b16 %v375
  %v1565 = vunpack.c.h.b16 %v375
  %v1566 = vunpack.c.l.b16 %v376
  %v1567 = vunpack.c.h.b16 %v376
  %v1568 = vunpack.c.l.b16 %v377
  %v1569 = vunpack.c.h.b16 %v377
  %v1570 = vunpack.c.l.b16 %v378
  %v1571 = vunpack.c.h.b16 %v378
  %v1572 = vunpack.c.l.b16 %v379
  %v1573 = vunpack.c.h.b16 %v379
  %v1574 = vunpack.c.l.b16 %v380
  %v1575 = vunpack.c.h.b16 %v380
  %v1576 = vunpack.c.l.b16 %v381
  %v1577 = vunpack.c.h.b16 %v381
  %v1578 = vunpack.c.l.b16 %v382
  %v1579 = vunpack.c.h.b16 %v382
  %v1580 = vunpack.c.l.b16 %v383
  %v1581 = vunpack.c.h.b16 %v383
  %v1582 = vunpack.c.l.b16 %v384
  %v1583 = vunpack.c.h.b16 %v384
  %v1584 = vunpack.c.l.b16 %v385
  %v1585 = vunpack.c.h.b16 %v385
  %v1586 = vunpack.c.l.b16 %v386
  %v1587 = vunpack.c.h.b16 %v386
  %v1588 = vunpack.c.l.b16 %v387
  %v1589 = vunpack.c.h.b16 %v387
  %v1590 = vunpack.c.l.b16 %v388
  %v1591 = vunpack.c.h.b16 %v388
  %v1592 = vunpack.c.l.b16 %v389
  %v1593 = vunpack.c.h.b16 %v389
  %v1594 = vunpack.c.l.b16 %v390
  %v1595 = vunpack.c.h.b16 %v390
  %v1596 = vunpack.c.l.b16 %v391
  %v1597 = vunpack.c.h.b16 %v391
  %v1598 = vunpack.c.l.b16 %v392
  %v1599 = vunpack.c.h.b16 %v392
  %v1600 = vunpack.c.l.b16 %v393
  %v1601 = vunpack.c.h.b16 %v393
  %v1602 = vunpack.c.l.b16 %v394
  %v1603 = vunpack.c.h.b16 %v394
  %v1604 = vunpack.c.l.b16 %v395
  %v1605 = vunpack.c.h.b16 %v395
  %v1606 = vunpack.c.l.b16 %v396
  %v1607 = vunpack.c.h.b16 %v396
  %v1608 = vunpack.c.l.b16 %v397
  %v1609 = vunpack.c.h.b16 %v397
  %v1610 = vunpack.c.l.b16 %v398
  %v1611 = vunpack.c.h.b16 %v398
  %v1612 = vunpack.c.l.b16 %v399
  %v1613 = vunpack.c.h.b16 %v399
  %v1614 = vunpack.c.l.b16 %v400
  %v1615 = vunpack.c.h.b16 %v400
  %v1616 = vunpack.c.l.b16 %v401
  %v1617 = vunpack.c.h.b16 %v401
  %v1618 = vunpack.c.l.b16 %v402
  %v1619 = vunpack.c.h.b16 %v402
  %v1620 = vunpack.c.l.b16 %v403
  %v1621 = vunpack.c.h.b16 %v403
  %v1622 = vunpack.c.l.b16 %v404
  %v1623 = vunpack.c.h.b16 %v404
  %v1624 = vunpack.c.l.b16 %v405
  %v1625 = vunpack.c.h.b16 %v405
  %v1626 = vunpack.c.l.b16 %v406
  %v1627 = vunpack.c.h.b16 %v406
  %v1628 = vunpack.c.l.b16 %v407
  %v1629 = vunpack.c.h.b16 %v407
  %v1630 = vunpack.c.l.b16 %v408
  %v1631 = vunpack.c.h.b16 %v408
  %v1632 = vunpack.c.l.b16 %v409
  %v1633 = vunpack.c.h.b16 %v409
  %v1634 = vpack.c.b16 %v874, %v866
  %v1635 = vpack.c.b16 %v875, %v867
  %v1636 = vpack.c.b16 %v876, %v868
  %v1637 = vpack.c.b16 %v877, %v869
  %v1638 = vpack.c.b16 %v878, %v870
  %v1639 = vpack.c.b16 %v879, %v871
  %v1640 = vpack.c.b16 %v880, %v872
  %v1641 = vpack.c.b16 %v881, %v873
  %v1642 = vpack.c.b16 %v890, %v882
  %v1643 = vpack.c.b16 %v891, %v883
  %v1644 = vpack.c.b16 %v892, %v884
  %v1645 = vpack.c.b16 %v893, %v885
  %v1646 = vpack.c.b16 %v894, %v886
  %v1647 = vpack.c.b16 %v895, %v887
  %v1648 = vpack.c.b16 %v896, %v888
  %v1649 = vpack.c.b16 %v897, %v889
  %v1650 = vpack.c.b16 %v906, %v898
  %v1651 = vpack.c.b16 %v907, %v899
  %v1652 = vpack.c.b16 %v908, %v900
  %v1653 = vpack.c.b16 %v909, %v901
  %v1654 = vpack.c.b16 %v910, %v902
  %v1655 = vpack.c.b16 %v911, %v903
  %v1656 = vpack.c.b16 %v912, %v904
  %v1657 = vpack.c.b16 %v913, %v905
  %v1658 = vpack.c.b16 %v922, %v914
  %v1659 = vpack.c.b16 %v923, %v915
  %v1660 = vpack.c.b16 %v924, %v916
  %v1661 = vpack.c.b16 %v925, %v917
  %v1662 = vpack.c.b16 %v926, %v918
  %v1663 = vpack.c.b16 %v927, %v919
  %v1664 = vpack.c.b16 %v928, %v920
  %v1665 = vpack.c.b16 %v929, %v921
  %v1666 = vpack.c.b16 %v938, %v930
  %v1667 = vpack.c.b16 %v939, %v931
  %v1668 = vpack.c.b16 %v940, %v932
  %v1669 = vpack.c.b16 %v941, %v933
  %v1670 = vpack.c.b16 %v942, %v934
  %v1671 = vpack.c.b16 %v943, %v935
  %v1672 = vpack.c.b16 %v944, %v936
  %v1673 = vpack.c.b16 %v945, %v937
  %v1674 = vpack.c.b16 %v954, %v946
  %v1675 = vpack.c.b16 %v955, %v947
  %v1676 = vpack.c.b16 %v956, %v948
  %v1677 = vpack.c.b16 %v957, %v949
  %v1678 = vpack.c.b16 %v958, %v950
  %v1679 = vpack.c.b16 %v959, %v951
  %v1680 = vpack.c.b16 %v960, %v952
  %v1681 = vpack.c.b16 %v961, %v953
  %v1682 = vpack.c.b16 %v970, %v962
  %v1683 = vpack.c.b16 %v971, %v963
  %v1684 = vpack.c.b16 %v972, %v964
  %v1685 = vpack.c.b16 %v973, %v965
  %v1686 = vpack.c.b16 %v974, %v966
  %v1687 = vpack.c.b16 %v975, %v967
  %v1688 = vpack.c.b16 %v976, %v968
  %v1689 = vpack.c.b16 %v977, %v969
  %v1690 = vpack.c.b16 %v986, %v978
  %v1691 = vpack.c.b16 %v987, %v979
  %v1692 = vpack.c.b16 %v988, %v980
  %v1693 = vpack.c.b16 %v989, %v981
  %v1694 = vpack.c.b16 %v990, %v982
  %v1695 = vpack.c.b16 %v991, %v983
  %v1696 = vpack.c.b16 %v992, %v984
  %v1697 = vpack.c.b16 %v993, %v985
  %v1698 = vpack.c.b16 %v1002, %v994
  %v1699 = vpack.c.b16 %v1003, %v995
  %v1700 = vpack.c.b16 %v1004, %v996
  %v1701 = vpack.c.b16 %v1005, %v997
  %v1702 = vpack.c.b16 %v1006, %v998
  %v1703 = vpack.c.b16 %v1007, %v999
  %v1704 = vpack.c.b16 %v1008, %v1000
  %v1705 = vpack.c.b16 %v1009, %v1001
  %v1706 = vpack.c.b16 %v1018, %v1010
  %v1707 = vpack.c.b16 %v1019, %v1011
  %v1708 = vpack.c.b16 %v1020, %v1012
  %v1709 = vpack.c.b16 %v1021, %v1013
  %v1710 = vpack.c.b16 %v1022, %v1014
  %v1711 = vpack.c.b16 %v1023, %v1015
  %v1712 = vpack.c.b16 %v1024, %v1016
  %v1713 = vpack.c.b16 %v1025, %v1017
  %v1714 = vpack.c.b16 %v1034, %v1026
  %v1715 = vpack.c.b16 %v1035, %v1027
  %v1716 = vpack.c.b16 %v1036, %v1028
  %v1717 = vpack.c.b16 %v1037, %v1029
  %v1718 = vpack.c.b16 %v1038, %v1030
  %v1719 = vpack.c.b16 %v1039, %v1031
  %v1720 = vpack.c.b16 %v1040, %v1032
  %v1721 = vpack.c.b16 %v1041, %v1033
  %v1722 = vpack.c.b16 %v1050, %v1042
  %v1723 = vpack.c.b16 %v1051, %v1043
  %v1724 = vpack.c.b16 %v1052, %v1044
  %v1725 = vpack.c.b16 %v1053, %v1045
  %v1726 = vpack.c.b16 %v1054, %v1046
  %v1727 = vpack.c.b16 %v1055, %v1047
  %v1728 = vpack.c.b16 %v1056, %v1048
  %v1729 = vpack.c.b16 %v1057, %v1049
  %v1730 = vpack.c.b16 %v1066, %v1058
  %v1731 = vpack.c.b16 %v1067, %v1059
  %v1732 = vpack.c.b16 %v1068, %v1060
  %v1733 = vpack.c.b16 %v1069, %v1061
  %v1734 = vpack.c.b16 %v1070, %v1062
  %v1735 = vpack.c.b16 %v1071, %v1063
  %v1736 = vpack.c.b16 %v1072, %v1064
  %v1737 = vpack.c.b16 %v1073, %v1065
  %v1738 = vpack.c.b16 %v1082, %v1074
  %v1739 = vpack.c.b16 %v1083, %v1075
  %v1740 = vpack.c.b16 %v1084, %v1076
  %v1741 = vpack.c.b16 %v1085, %v1077
  %v1742 = vpack.c.b16 %v1086, %v1078
  %v1743 = vpack.c.b16 %v1087, %v1079
  %v1744 = vpack.c.b16 %v1088, %v1080
  %v1745 = vpack.c.b16 %v1089, %v1081
  %v1746 = vpack.c.b16 %v1098, %v1090
  %v1747 = vpack.c.b16 %v1099, %v1091
  %v1748 = vpack.c.b16 %v1100, %v1092
  %v1749 = vpack.c.b16 %v1101, %v1093
  %v1750 = vpack.c.b16 %v1102, %v1094
  %v1751 = vpack.c.b16 %v1103, %v1095
  %v1752 = vpack.c.b16 %v1104, %v1096
  %v1753 = vpack.c.b16 %v1105, %v1097
  %v1754 = vpack.c.b16 %v1114, %v1106
  %v1755 = vpack.c.b16 %v1115, %v1107
  %v1756 = vpack.c.b16 %v1116, %v1108
  %v1757 = vpack.c.b16 %v1117, %v1109
  %v1758 = vpack.c.b16 %v1118, %v1110
  %v1759 = vpack.c.b16 %v1119, %v1111
  %v1760 = vpack.c.b16 %v1120, %v1112
  %v1761 = vpack.c.b16 %v1121, %v1113
  %v1762 = vpack.c.b16 %v1130, %v1122
  %v1763 = vpack.c.b16 %v1131, %v1123
  %v1764 = vpack.c.b16 %v1132, %v1124
  %v1765 = vpack.c.b16 %v1133, %v1125
  %v1766 = vpack.c.b16 %v1134, %v1126
  %v1767 = vpack.c.b16 %v1135, %v1127
  %v1768 = vpack.c.b16 %v1136, %v1128
  %v1769 = vpack.c.b16 %v1137, %v1129
  %v1770 = vpack.c.b16 %v1146, %v1138
  %v1771 = vpack.c.b16 %v1147, %v1139
  %v1772 = vpack.c.b16 %v1148, %v1140
  %v1773 = vpack.c.b16 %v1149, %v1141
  %v1774 = vpack.c.b16 %v1150, %v1142
  %v1775 = vpack.c.b16 %v1151, %v1143
  %v1776 = vpack.c.b16 %v1152, %v1144
  %v1777 = vpack.c.b16 %v1153, %v1145
  %v1778 = vpack.c.b16 %v1162, %v1154
  %v1779 = vpack.c.b16 %v1163, %v1155
  %v1780 = vpack.c.b16 %v1164, %v1156
  %v1781 = vpack.c.b16 %v1165, %v1157
  %v1782 = vpack.c.b16 %v1166, %v1158
  %v1783 = vpack.c.b16 %v1167, %v1159
  %v1784 = vpack.c.b16 %v1168, %v1160
  %v1785 = vpack.c.b16 %v1169, %v1161
  %v1786 = vpack.c.b16 %v1178, %v1170
  %v1787 = vpack.c.b16 %v1179, %v1171
  %v1788 = vpack.c.b16 %v1180, %v1172
  %v1789 = vpack.c.b16 %v1181, %v1173
  %v1790 = vpack.c.b16 %v1182, %v1174
  %v1791 = vpack.c.b16 %v1183, %v1175
  %v1792 = vpack.c.b16 %v1184, %v1176
  %v1793 = vpack.c.b16 %v1185, %v1177
  %v1794 = vpack.c.b16 %v1194, %v1186
  %v1795 = vpack.c.b16 %v1195, %v1187
  %v1796 = vpack.c.b16 %v1196, %v1188
  %v1797 = vpack.c.b16 %v1197, %v1189
  %v1798 = vpack.c.b16 %v1198, %v1190
  %v1799 = vpack.c.b16 %v1199, %v1191
  %v1800 = vpack.c.b16 %v1200, %v1192
  %v1801 = vpack.c.b16 %v1201, %v1193
  %v1802 = vpack.c.b16 %v1210, %v1202
  %v1803 = vpack.c.b16 %v1211, %v1203
  %v1804 = vpack.c.b16 %v1212, %v1204
  %v1805 = vpack.c.b16 %v1213, %v1205
  %v1806 = vpack.c.b16 %v1214, %v1206
  %v1807 = vpack.c.b16 %v1215, %v1207
  %v1808 = vpack.c.b16 %v1216, %v1208
  %v1809 = vpack.c.b16 %v1217, %v1209
  %v1810 = vpack.c.b16 %v1226, %v1218
  %v1811 = vpack.c.b16 %v1227, %v1219
  %v1812 = vpack.c.b16 %v1228, %v1220
  %v1813 = vpack.c.b16 %v1229, %v1221
  %v1814 = vpack.c.b16 %v1230, %v1222
  %v1815 = vpack.c.b16 %v1231, %v1223
  %v1816 = vpack.c.b16 %v1232, %v1224
  %v1817 = vpack.c.b16 %v1233, %v1225
  %v1818 = vpack.c.b16 %v1242, %v1234
  %v1819 = vpack.c.b16 %v1243, %v1235
  %v1820 = vpack.c.b16 %v1244, %v1236
  %v1821 = vpack.c.b16 %v1245, %v1237
  %v1822 = vpack.c.b16 %v1246, %v1238
  %v1823 = vpack.c.b16 %v1247, %v1239
  %v1824 = vpack.c.b16 %v1248, %v1240
  %v1825 = vpack.c.b16 %v1249, %v1241
  %v1826 = vpack.c.b16 %v1258, %v1250
  %v1827 = vpack.c.b16 %v1259, %v1251
  %v1828 = vpack.c.b16 %v1260, %v1252
  %v1829 = vpack.c.b16 %v1261, %v1253
  %v1830 = vpack.c.b16 %v1262, %v1254
  %v1831 = vpack.c.b16 %v1263, %v1255
  %v1832 = vpack.c.b16 %v1264, %v1256
  %v1833 = vpack.c.b16 %v1265, %v1257
  %v1834 = vpack.c.b16 %v1274, %v1266
  %v1835 = vpack.c.b16 %v1275, %v1267
  %v1836 = vpack.c.b16 %v1276, %v1268
  %v1837 = vpack.c.b16 %v1277, %v1269
  %v1838 = vpack.c.b16 %v1278, %v1270
  %v1839 = vpack.c.b16 %v1279, %v1271
  %v1840 = vpack.c.b16 %v1280, %v1272
  %v1841 = vpack.c.b16 %v1281, %v1273
  %v1842 = vpack.c.b16 %v1290, %v1282
  %v1843 = vpack.c.b16 %v1291, %v1283
  %v1844 = vpack.c.b16 %v1292, %v1284
  %v1845 = vpack.c.b16 %v1293, %v1285
  %v1846 = vpack.c.b16 %v1294, %v1286
  %v1847 = vpack.c.b16 %v1295, %v1287
  %v1848 = vpack.c.b16 %v1296, %v1288
  %v1849 = vpack.c.b16 %v1297, %v1289
  %v1850 = vpack.c.b16 %v1306, %v1298
  %v1851 = vpack.c.b16 %v1307, %v1299
  %v1852 = vpack.c.b16 %v1308, %v1300
  %v1853 = vpack.c.b16 %v1309, %v1301
  %v1854 = vpack.c.b16 %v1310, %v1302
  %v1855 = vpack.c.b16 %v1311, %v1303
  %v1856 = vpack.c.b16 %v1312, %v1304
  %v1857 = vpack.c.b16 %v1313, %v1305
  %v1858 = vpack.c.b16 %v1322, %v1314
  %v1859 = vpack.c.b16 %v1323, %v1315
  %v1860 = vpack.c.b16 %v1324, %v1316
  %v1861 = vpack.c.b16 %v1325, %v1317
  %v1862 = vpack.c.b16 %v1326, %v1318
  %v1863 = vpack.c.b16 %v1327, %v1319
  %v1864 = vpack.c.b16 %v1328, %v1320
  %v1865 = vpack.c.b16 %v1329, %v1321
  %v1866 = vpack.c.b16 %v1338, %v1330
  %v1867 = vpack.c.b16 %v1339, %v1331
  %v1868 = vpack.c.b16 %v1340, %v1332
  %v1869 = vpack.c.b16 %v1341, %v1333
  %v1870 = vpack.c.b16 %v1342, %v1334
  %v1871 = vpack.c.b16 %v1343, %v1335
  %v1872 = vpack.c.b16 %v1344, %v1336
  %v1873 = vpack.c.b16 %v1345, %v1337
  %v1874 = vpack.c.b16 %v1354, %v1346
  %v1875 = vpack.c.b16 %v1355, %v1347
  %v1876 = vpack.c.b16 %v1356, %v1348
  %v1877 = vpack.c.b16 %v1357, %v1349
  %v1878 = vpack.c.b16 %v1358, %v1350
  %v1879 = vpack.c.b16 %v1359, %v1351
  %v1880 = vpack.c.b16 %v1360, %v1352
  %v1881 = vpack.c.b16 %v1361, %v1353
  %v1882 = vpack.c.b16 %v1370, %v1362
  %v1883 = vpack.c.b16 %v1371, %v1363
  %v1884 = vpack.c.b16 %v1372, %v1364
  %v1885 = vpack.c.b16 %v1373, %v1365
  %v1886 = vpack.c.b16 %v1374, %v1366
  %v1887 = vpack.c.b16 %v1375, %v1367
  %v1888 = vpack.c.b16 %v1376, %v1368
  %v1889 = vpack.c.b16 %v1377, %v1369
  %v1890 = vpack.c.b16 %v1386, %v1378
  %v1891 = vpack.c.b16 %v1387, %v1379
  %v1892 = vpack.c.b16 %v1388, %v1380
  %v1893 = vpack.c.b16 %v1389, %v1381
  %v1894 = vpack.c.b16 %v1390, %v1382
  %v1895 = vpack.c.b16 %v1391, %v1383
  %v1896 = vpack.c.b16 %v1392, %v1384
  %v1897 = vpack.c.b16 %v1393, %v1385
  %v1898 = vpack.c.b16 %v1402, %v1394
  %v1899 = vpack.c.b16 %v1403, %v1395
  %v1900 = vpack.c.b16 %v1404, %v1396
  %v1901 = vpack.c.b16 %v1405, %v1397
  %v1902 = vpack.c.b16 %v1406, %v1398
  %v1903 = vpack.c.b16 %v1407, %v1399
  %v1904 = vpack.c.b16 %v1408, %v1400
  %v1905 = vpack.c.b16 %v1409, %v1401
  %v1906 = vpack.c.b16 %v1418, %v1410
  %v1907 = vpack.c.b16 %v1419, %v1411
  %v1908 = vpack.c.b16 %v1420, %v1412
  %v1909 = vpack.c.b16 %v1421, %v1413
  %v1910 = vpack.c.b16 %v1422, %v1414
  %v1911 = vpack.c.b16 %v1423, %v1415
  %v1912 = vpack.c.b16 %v1424, %v1416
  %v1913 = vpack.c.b16 %v1425, %v1417
  %v1914 = vpack.c.b16 %v1434, %v1426
  %v1915 = vpack.c.b16 %v1435, %v1427
  %v1916 = vpack.c.b16 %v1436, %v1428
  %v1917 = vpack.c.b16 %v1437, %v1429
  %v1918 = vpack.c.b16 %v1438, %v1430
  %v1919 = vpack.c.b16 %v1439, %v1431
  %v1920 = vpack.c.b16 %v1440, %v1432
  %v1921 = vpack.c.b16 %v1441, %v1433
  %v1922 = vpack.c.b16 %v1450, %v1442
  %v1923 = vpack.c.b16 %v1451, %v1443
  %v1924 = vpack.c.b16 %v1452, %v1444
  %v1925 = vpack.c.b16 %v1453, %v1445
  %v1926 = vpack.c.b16 %v1454, %v1446
  %v1927 = vpack.c.b16 %v1455, %v1447
  %v1928 = vpack.c.b16 %v1456, %v1448
  %v1929 = vpack.c.b16 %v1457, %v1449
  %v1930 = vpack.c.b16 %v1466, %v1458
  %v1931 = vpack.c.b16 %v1467, %v1459
  %v1932 = vpack.c.b16 %v1468, %v1460
  %v1933 = vpack.c.b16 %v1469, %v1461
  %v1934 = vpack.c.b16 %v1470, %v1462
  %v1935 = vpack.c.b16 %v1471, %v1463
  %v1936 = vpack.c.b16 %v1472, %v1464
  %v1937 = vpack.c.b16 %v1473, %v1465
  %v1938 = vpack.c.b16 %v1482, %v1474
  %v1939 = vpack.c.b16 %v1483, %v1475
  %v1940 = vpack.c.b16 %v1484, %v1476
  %v1941 = vpack.c.b16 %v1485, %v1477
  %v1942 = vpack.c.b16 %v1486, %v1478
  %v1943 = vpack.c.b16 %v1487, %v1479
  %v1944 = vpack.c.b16 %v1488, %v1480
  %v1945 = vpack.c.b16 %v1489, %v1481
  %v1946 = vpack.c.b16 %v1498, %v1490
  %v1947 = vpack.c.b16 %v1499, %v1491
  %v1948 = vpack.c.b16 %v1500, %v1492
  %v1949 = vpack.c.b16 %v1501, %v1493
  %v1950 = vpack.c.b16 %v1502, %v1494
  %v1951 = vpack.c.b16 %v1503, %v1495
  %v1952 = vpack.c.b16 %v1504, %v1496
  %v1953 = vpack.c.b16 %v1505, %v1497
  %v1954 = vpack.c.b16 %v1514, %v1506
  %v1955 = vpack.c.b16 %v1515, %v1507
  %v1956 = vpack.c.b16 %v1516, %v1508
  %v1957 = vpack.c.b16 %v1517, %v1509
  %v1958 = vpack.c.b16 %v1518, %v1510
  %v1959 = vpack.c.b16 %v1519, %v1511
  %v1960 = vpack.c.b16 %v1520, %v1512
  %v1961 = vpack.c.b16 %v1521, %v1513
  %v1962 = vpack.c.b16 %v1530, %v1522
  %v1963 = vpack.c.b16 %v1531, %v1523
  %v1964 = vpack.c.b16 %v1532, %v1524
  %v1965 = vpack.c.b16 %v1533, %v1525
  %v1966 = vpack.c.b16 %v1534, %v1526
  %v1967 = vpack.c.b16 %v1535, %v1527
  %v1968 = vpack.c.b16 %v1536, %v1528
  %v1969 = vpack.c.b16 %v1537, %v1529
  %v1970 = vpack.c.b16 %v1546, %v1538
  %v1971 = vpack.c.b16 %v1547, %v1539
  %v1972 = vpack.c.b16 %v1548, %v1540
  %v1973 = vpack.c.b16 %v1549, %v1541
  %v1974 = vpack.c.b16 %v1550, %v1542
  %v1975 = vpack.c.b16 %v1551, %v1543
  %v1976 = vpack.c.b16 %v1552, %v1544
  %v1977 = vpack.c.b16 %v1553, %v1545
  %v1978 = vpack.c.b16 %v1562, %v1554
  %v1979 = vpack.c.b16 %v1563, %v1555
  %v1980 = vpack.c.b16 %v1564, %v1556
  %v1981 = vpack.c.b16 %v1565, %v1557
  %v1982 = vpack.c.b16 %v1566, %v1558
  %v1983 = vpack.c.b16 %v1567, %v1559
  %v1984 = vpack.c.b16 %v1568, %v1560
  %v1985 = vpack.c.b16 %v1569, %v1561
  %v1986 = vpack.c.b16 %v1578, %v1570
  %v1987 = vpack.c.b16 %v1579, %v1571
  %v1988 = vpack.c.b16 %v1580, %v1572
  %v1989 = vpack.c.b16 %v1581, %v1573
  %v1990 = vpack.c.b16 %v1582, %v1574
  %v1991 = vpack.c.b16 %v1583, %v1575
  %v1992 = vpack.c.b16 %v1584, %v1576
  %v1993 = vpack.c.b16 %v1585, %v1577
  %v1994 = vpack.c.b16 %v1594, %v1586
  %v1995 = vpack.c.b16 %v1595, %v1587
  %v1996 = vpack.c.b16 %v1596, %v1588
  %v1997 = vpack.c.b16 %v1597, %v1589
  %v1998 = vpack.c.b16 %v1598, %v1590
  %v1999 = vpack.c.b16 %v1599, %v1591
  %v2000 = vpack.c.b16 %v1600, %v1592
  %v2001 = vpack.c.b16 %v1601, %v1593
  %v2002 = vpack.c.b16 %v1610, %v1602
  %v2003 = vpack.c.b16 %v1611, %v1603
  %v2004 = vpack.c.b16 %v1612, %v1604
  %v2005 = vpack.c.b16 %v1613, %v1605
  %v2006 = vpack.c.b16 %v1614, %v1606
  %v2007 = vpack.c.b16 %v1615, %v1607
  %v2008 = vpack.c.b16 %v1616, %v1608
  %v2009 = vpack.c.b16 %v1617, %v1609
  %v2010 = vpack.c.b16 %v1626, %v1618
  %v2011 = vpack.c.b16 %v1627, %v1619
  %v2012 = vpack.c.b16 %v1628, %v1620
  %v2013 = vpack.c.b16 %v1629, %v1621
  %v2014 = vpack.c.b16 %v1630, %v1622
  %v2015 = vpack.c.b16 %v1631, %v1623
  %v2016 = vpack.c.b16 %v1632, %v1624
  %v2017 = vpack.c.b16 %v1633, %v1625
  %2402 = vmatprep.subr.bf16.mxu0 %v1635
  %2403 = vmatpush1.bf16.msra.mxu0 %v1634
  %2404 = vmatprep.subr.bf16.mxu0 %v1643
  %2405 = vmatpush1.bf16.msra.mxu0 %v1642
  %2406 = vmatprep.subr.bf16.mxu0 %v1651
  %2407 = vmatpush1.bf16.msra.mxu0 %v1650
  %2408 = vmatprep.subr.bf16.mxu0 %v1659
  %2409 = vmatpush1.bf16.msra.mxu0 %v1658
  %2410 = vmatprep.subr.bf16.mxu0 %v1667
  %2411 = vmatpush1.bf16.msra.mxu0 %v1666
  %2412 = vmatprep.subr.bf16.mxu0 %v1675
  %2413 = vmatpush1.bf16.msra.mxu0 %v1674
  %2414 = vmatprep.subr.bf16.mxu0 %v1683
  %2415 = vmatpush1.bf16.msra.mxu0 %v1682
  %2416 = vmatprep.subr.bf16.mxu0 %v1691
  %2417 = vmatpush1.bf16.msra.mxu0 %v1690
  %2418 = vmatprep.subr.bf16.mxu0 %v1699
  %2419 = vmatpush1.bf16.msra.mxu0 %v1698
  %2420 = vmatprep.subr.bf16.mxu0 %v1707
  %2421 = vmatpush1.bf16.msra.mxu0 %v1706
  %2422 = vmatprep.subr.bf16.mxu0 %v1715
  %2423 = vmatpush1.bf16.msra.mxu0 %v1714
  %2424 = vmatprep.subr.bf16.mxu0 %v1723
  %2425 = vmatpush1.bf16.msra.mxu0 %v1722
  %2426 = vmatprep.subr.bf16.mxu0 %v1731
  %2427 = vmatpush1.bf16.msra.mxu0 %v1730
  %2428 = vmatprep.subr.bf16.mxu0 %v1739
  %2429 = vmatpush1.bf16.msra.mxu0 %v1738
  %2430 = vmatprep.subr.bf16.mxu0 %v1747
  %2431 = vmatpush1.bf16.msra.mxu0 %v1746
  %2432 = vmatprep.subr.bf16.mxu0 %v1755
  %2433 = vmatpush1.bf16.msra.mxu0 %v1754
  %2434 = vmatprep.mubr.bf16.mxu0 %v471
  %2435 = vmatmul.mubr.bf16.gmra.mrb[0].mxu0 %v470
  %v2436 = vpop.f32.mrb[0].mxu0
  %v2437 = vadd.f32 %v415, %v2436
  %v2438 = vpop.f32.mrb[0].mxu0
  %v2439 = vadd.f32 %v419, %v2438
  %v2440 = vpop.f32.mrb[0].mxu0
  %v2441 = vadd.f32 %v415, %v2440
  %v2442 = vpop.f32.mrb[0].mxu0
  %v2443 = vadd.f32 %v419, %v2442
  %2444 = vdwg.mxu0
  %2445 = vmatprep.subr.bf16.mxu0 %v1763
  %2446 = vmatpush1.bf16.msra.mxu0 %v1762
  %2447 = vmatprep.subr.bf16.mxu0 %v1771
  %2448 = vmatpush1.bf16.msra.mxu0 %v1770
  %2449 = vmatprep.subr.bf16.mxu0 %v1779
  %2450 = vmatpush1.bf16.msra.mxu0 %v1778
  %2451 = vmatprep.subr.bf16.mxu0 %v1787
  %2452 = vmatpush1.bf16.msra.mxu0 %v1786
  %2453 = vmatprep.subr.bf16.mxu0 %v1795
  %2454 = vmatpush1.bf16.msra.mxu0 %v1794
  %2455 = vmatprep.subr.bf16.mxu0 %v1803
  %2456 = vmatpush1.bf16.msra.mxu0 %v1802
  %2457 = vmatprep.subr.bf16.mxu0 %v1811
  %2458 = vmatpush1.bf16.msra.mxu0 %v1810
  %2459 = vmatprep.subr.bf16.mxu0 %v1819
  %2460 = vmatpush1.bf16.msra.mxu0 %v1818
  %2461 = vmatprep.subr.bf16.mxu0 %v1827
  %2462 = vmatpush1.bf16.msra.mxu0 %v1826
  %2463 = vmatprep.subr.bf16.mxu0 %v1835
  %2464 = vmatpush1.bf16.msra.mxu0 %v1834
  %2465 = vmatprep.subr.bf16.mxu0 %v1843
  %2466 = vmatpush1.bf16.msra.mxu0 %v1842
  %2467 = vmatprep.subr.bf16.mxu0 %v1851
  %2468 = vmatpush1.bf16.msra.mxu0 %v1850
  %2469 = vmatprep.subr.bf16.mxu0 %v1859
  %2470 = vmatpush1.bf16.msra.mxu0 %v1858
  %2471 = vmatprep.subr.bf16.mxu0 %v1867
  %2472 = vmatpush1.bf16.msra.mxu0 %v1866
  %2473 = vmatprep.subr.bf16.mxu0 %v1875
  %2474 = vmatpush1.bf16.msra.mxu0 %v1874
  %2475 = vmatprep.subr.bf16.mxu0 %v1883
  %2476 = vmatpush1.bf16.msra.mxu0 %v1882
  %2477 = vmatprep.mubr.bf16.mxu0 %v473
  %2478 = vmatmul.mubr.bf16.gmra.mrb[0].mxu0 %v472
  %v2479 = vpop.f32.mrb[0].mxu0
  %v2480 = vadd.f32 %v2437, %v2479
  %v2481 = vpop.f32.mrb[0].mxu0
  %v2482 = vadd.f32 %v2439, %v2481
  %v2483 = vpop.f32.mrb[0].mxu0
  %v2484 = vadd.f32 %v2441, %v2483
  %v2485 = vpop.f32.mrb[0].mxu0
  %v2486 = vadd.f32 %v2443, %v2485
  %2487 = vdwg.mxu0
  %2488 = vmatprep.subr.bf16.mxu0 %v1891
  %2489 = vmatpush1.bf16.msra.mxu0 %v1890
  %2490 = vmatprep.subr.bf16.mxu0 %v1899
  %2491 = vmatpush1.bf16.msra.mxu0 %v1898
  %2492 = vmatprep.subr.bf16.mxu0 %v1907
  %2493 = vmatpush1.bf16.msra.mxu0 %v1906
  %2494 = vmatprep.subr.bf16.mxu0 %v1915
  %2495 = vmatpush1.bf16.msra.mxu0 %v1914
  %2496 = vmatprep.subr.bf16.mxu0 %v1923
  %2497 = vmatpush1.bf16.msra.mxu0 %v1922
  %2498 = vmatprep.subr.bf16.mxu0 %v1931
  %2499 = vmatpush1.bf16.msra.mxu0 %v1930
  %2500 = vmatprep.subr.bf16.mxu0 %v1939
  %2501 = vmatpush1.bf16.msra.mxu0 %v1938
  %2502 = vmatprep.subr.bf16.mxu0 %v1947
  %2503 = vmatpush1.bf16.msra.mxu0 %v1946
  %2504 = vmatprep.subr.bf16.mxu0 %v1955
  %2505 = vmatpush1.bf16.msra.mxu0 %v1954
  %2506 = vmatprep.subr.bf16.mxu0 %v1963
  %2507 = vmatpush1.bf16.msra.mxu0 %v1962
  %2508 = vmatprep.subr.bf16.mxu0 %v1971
  %2509 = vmatpush1.bf16.msra.mxu0 %v1970
  %2510 = vmatprep.subr.bf16.mxu0 %v1979
  %2511 = vmatpush1.bf16.msra.mxu0 %v1978
  %2512 = vmatprep.subr.bf16.mxu0 %v1987
  %2513 = vmatpush1.bf16.msra.mxu0 %v1986
  %2514 = vmatprep.subr.bf16.mxu0 %v1995
  %2515 = vmatpush1.bf16.msra.mxu0 %v1994
  %2516 = vmatprep.subr.bf16.mxu0 %v2003
  %2517 = vmatpush1.bf16.msra.mxu0 %v2002
  %2518 = vmatprep.subr.bf16.mxu0 %v2011
  %2519 = vmatpush1.bf16.msra.mxu0 %v2010
  %2520 = vmatprep.mubr.bf16.mxu0 %v475
  %2521 = vmatmul.mubr.bf16.gmra.mrb[0].mxu0 %v474
  %v2522 = vpop.f32.mrb[0].mxu0
  %v2523 = vadd.f32 %v2480, %v2522
  %v2524 = vpop.f32.mrb[0].mxu0
  %v2525 = vadd.f32 %v2482, %v2524
  %v2526 = vpop.f32.mrb[0].mxu0
  %v2527 = vadd.f32 %v2484, %v2526
  %v2528 = vpop.f32.mrb[0].mxu0
  %v2529 = vadd.f32 %v2486, %v2528
  %2530 = vdwg.mxu0
  %2531 = vmatprep.subr.bf16.mxu0 %v1637
  %2532 = vmatpush1.bf16.msra.mxu0 %v1636
  %2533 = vmatprep.subr.bf16.mxu0 %v1645
  %2534 = vmatpush1.bf16.msra.mxu0 %v1644
  %2535 = vmatprep.subr.bf16.mxu0 %v1653
  %2536 = vmatpush1.bf16.msra.mxu0 %v1652
  %2537 = vmatprep.subr.bf16.mxu0 %v1661
  %2538 = vmatpush1.bf16.msra.mxu0 %v1660
  %2539 = vmatprep.subr.bf16.mxu0 %v1669
  %2540 = vmatpush1.bf16.msra.mxu0 %v1668
  %2541 = vmatprep.subr.bf16.mxu0 %v1677
  %2542 = vmatpush1.bf16.msra.mxu0 %v1676
  %2543 = vmatprep.subr.bf16.mxu0 %v1685
  %2544 = vmatpush1.bf16.msra.mxu0 %v1684
  %2545 = vmatprep.subr.bf16.mxu0 %v1693
  %2546 = vmatpush1.bf16.msra.mxu0 %v1692
  %2547 = vmatprep.subr.bf16.mxu0 %v1701
  %2548 = vmatpush1.bf16.msra.mxu0 %v1700
  %2549 = vmatprep.subr.bf16.mxu0 %v1709
  %2550 = vmatpush1.bf16.msra.mxu0 %v1708
  %2551 = vmatprep.subr.bf16.mxu0 %v1717
  %2552 = vmatpush1.bf16.msra.mxu0 %v1716
  %2553 = vmatprep.subr.bf16.mxu0 %v1725
  %2554 = vmatpush1.bf16.msra.mxu0 %v1724
  %2555 = vmatprep.subr.bf16.mxu0 %v1733
  %2556 = vmatpush1.bf16.msra.mxu0 %v1732
  %2557 = vmatprep.subr.bf16.mxu0 %v1741
  %2558 = vmatpush1.bf16.msra.mxu0 %v1740
  %2559 = vmatprep.subr.bf16.mxu0 %v1749
  %2560 = vmatpush1.bf16.msra.mxu0 %v1748
  %2561 = vmatprep.subr.bf16.mxu0 %v1757
  %2562 = vmatpush1.bf16.msra.mxu0 %v1756
  %2563 = vmatprep.mubr.bf16.mxu0 %v471
  %2564 = vmatmul.mubr.bf16.gmra.mrb[0].mxu0 %v470
  %v2565 = vpop.f32.mrb[0].mxu0
  %v2566 = vadd.f32 %v423, %v2565
  %v2567 = vpop.f32.mrb[0].mxu0
  %v2568 = vadd.f32 %v427, %v2567
  %v2569 = vpop.f32.mrb[0].mxu0
  %v2570 = vadd.f32 %v423, %v2569
  %v2571 = vpop.f32.mrb[0].mxu0
  %v2572 = vadd.f32 %v427, %v2571
  %2573 = vdwg.mxu0
  %2574 = vmatprep.subr.bf16.mxu0 %v1765
  %2575 = vmatpush1.bf16.msra.mxu0 %v1764
  %2576 = vmatprep.subr.bf16.mxu0 %v1773
  %2577 = vmatpush1.bf16.msra.mxu0 %v1772
  %2578 = vmatprep.subr.bf16.mxu0 %v1781
  %2579 = vmatpush1.bf16.msra.mxu0 %v1780
  %2580 = vmatprep.subr.bf16.mxu0 %v1789
  %2581 = vmatpush1.bf16.msra.mxu0 %v1788
  %2582 = vmatprep.subr.bf16.mxu0 %v1797
  %2583 = vmatpush1.bf16.msra.mxu0 %v1796
  %2584 = vmatprep.subr.bf16.mxu0 %v1805
  %2585 = vmatpush1.bf16.msra.mxu0 %v1804
  %2586 = vmatprep.subr.bf16.mxu0 %v1813
  %2587 = vmatpush1.bf16.msra.mxu0 %v1812
  %2588 = vmatprep.subr.bf16.mxu0 %v1821
  %2589 = vmatpush1.bf16.msra.mxu0 %v1820
  %2590 = vmatprep.subr.bf16.mxu0 %v1829
  %2591 = vmatpush1.bf16.msra.mxu0 %v1828
  %2592 = vmatprep.subr.bf16.mxu0 %v1837
  %2593 = vmatpush1.bf16.msra.mxu0 %v1836
  %2594 = vmatprep.subr.bf16.mxu0 %v1845
  %2595 = vmatpush1.bf16.msra.mxu0 %v1844
  %2596 = vmatprep.subr.bf16.mxu0 %v1853
  %2597 = vmatpush1.bf16.msra.mxu0 %v1852
  %2598 = vmatprep.subr.bf16.mxu0 %v1861
  %2599 = vmatpush1.bf16.msra.mxu0 %v1860
  %2600 = vmatprep.subr.bf16.mxu0 %v1869
  %2601 = vmatpush1.bf16.msra.mxu0 %v1868
  %2602 = vmatprep.subr.bf16.mxu0 %v1877
  %2603 = vmatpush1.bf16.msra.mxu0 %v1876
  %2604 = vmatprep.subr.bf16.mxu0 %v1885
  %2605 = vmatpush1.bf16.msra.mxu0 %v1884
  %2606 = vmatprep.mubr.bf16.mxu0 %v473
  %2607 = vmatmul.mubr.bf16.gmra.mrb[0].mxu0 %v472
  %v2608 = vpop.f32.mrb[0].mxu0
  %v2609 = vadd.f32 %v2566, %v2608
  %v2610 = vpop.f32.mrb[0].mxu0
  %v2611 = vadd.f32 %v2568, %v2610
  %v2612 = vpop.f32.mrb[0].mxu0
  %v2613 = vadd.f32 %v2570, %v2612
  %v2614 = vpop.f32.mrb[0].mxu0
  %v2615 = vadd.f32 %v2572, %v2614
  %2616 = vdwg.mxu0
  %2617 = vmatprep.subr.bf16.mxu0 %v1893
  %2618 = vmatpush1.bf16.msra.mxu0 %v1892
  %2619 = vmatprep.subr.bf16.mxu0 %v1901
  %2620 = vmatpush1.bf16.msra.mxu0 %v1900
  %2621 = vmatprep.subr.bf16.mxu0 %v1909
  %2622 = vmatpush1.bf16.msra.mxu0 %v1908
  %2623 = vmatprep.subr.bf16.mxu0 %v1917
  %2624 = vmatpush1.bf16.msra.mxu0 %v1916
  %2625 = vmatprep.subr.bf16.mxu0 %v1925
  %2626 = vmatpush1.bf16.msra.mxu0 %v1924
  %2627 = vmatprep.subr.bf16.mxu0 %v1933
  %2628 = vmatpush1.bf16.msra.mxu0 %v1932
  %2629 = vmatprep.subr.bf16.mxu0 %v1941
  %2630 = vmatpush1.bf16.msra.mxu0 %v1940
  %2631 = vmatprep.subr.bf16.mxu0 %v1949
  %2632 = vmatpush1.bf16.msra.mxu0 %v1948
  %2633 = vmatprep.subr.bf16.mxu0 %v1957
  %2634 = vmatpush1.bf16.msra.mxu0 %v1956
  %2635 = vmatprep.subr.bf16.mxu0 %v1965
  %2636 = vmatpush1.bf16.msra.mxu0 %v1964
  %2637 = vmatprep.subr.bf16.mxu0 %v1973
  %2638 = vmatpush1.bf16.msra.mxu0 %v1972
  %2639 = vmatprep.subr.bf16.mxu0 %v1981
  %2640 = vmatpush1.bf16.msra.mxu0 %v1980
  %2641 = vmatprep.subr.bf16.mxu0 %v1989
  %2642 = vmatpush1.bf16.msra.mxu0 %v1988
  %2643 = vmatprep.subr.bf16.mxu0 %v1997
  %2644 = vmatpush1.bf16.msra.mxu0 %v1996
  %2645 = vmatprep.subr.bf16.mxu0 %v2005
  %2646 = vmatpush1.bf16.msra.mxu0 %v2004
  %2647 = vmatprep.subr.bf16.mxu0 %v2013
  %2648 = vmatpush1.bf16.msra.mxu0 %v2012
  %2649 = vmatprep.mubr.bf16.mxu0 %v475
  %2650 = vmatmul.mubr.bf16.gmra.mrb[0].mxu0 %v474
  %v2651 = vpop.f32.mrb[0].mxu0
  %v2652 = vadd.f32 %v2609, %v2651
  %v2653 = vpop.f32.mrb[0].mxu0
  %v2654 = vadd.f32 %v2611, %v2653
  %v2655 = vpop.f32.mrb[0].mxu0
  %v2656 = vadd.f32 %v2613, %v2655
  %v2657 = vpop.f32.mrb[0].mxu0
  %v2658 = vadd.f32 %v2615, %v2657
  %2659 = vdwg.mxu0
  %2660 = vmatprep.subr.bf16.mxu0 %v1639
  %2661 = vmatpush1.bf16.msra.mxu0 %v1638
  %2662 = vmatprep.subr.bf16.mxu0 %v1647
  %2663 = vmatpush1.bf16.msra.mxu0 %v1646
  %2664 = vmatprep.subr.bf16.mxu0 %v1655
  %2665 = vmatpush1.bf16.msra.mxu0 %v1654
  %2666 = vmatprep.subr.bf16.mxu0 %v1663
  %2667 = vmatpush1.bf16.msra.mxu0 %v1662
  %2668 = vmatprep.subr.bf16.mxu0 %v1671
  %2669 = vmatpush1.bf16.msra.mxu0 %v1670
  %2670 = vmatprep.subr.bf16.mxu0 %v1679
  %2671 = vmatpush1.bf16.msra.mxu0 %v1678
  %2672 = vmatprep.subr.bf16.mxu0 %v1687
  %2673 = vmatpush1.bf16.msra.mxu0 %v1686
  %2674 = vmatprep.subr.bf16.mxu0 %v1695
  %2675 = vmatpush1.bf16.msra.mxu0 %v1694
  %2676 = vmatprep.subr.bf16.mxu0 %v1703
  %2677 = vmatpush1.bf16.msra.mxu0 %v1702
  %2678 = vmatprep.subr.bf16.mxu0 %v1711
  %2679 = vmatpush1.bf16.msra.mxu0 %v1710
  %2680 = vmatprep.subr.bf16.mxu0 %v1719
  %2681 = vmatpush1.bf16.msra.mxu0 %v1718
  %2682 = vmatprep.subr.bf16.mxu0 %v1727
  %2683 = vmatpush1.bf16.msra.mxu0 %v1726
  %2684 = vmatprep.subr.bf16.mxu0 %v1735
  %2685 = vmatpush1.bf16.msra.mxu0 %v1734
  %2686 = vmatprep.subr.bf16.mxu0 %v1743
  %2687 = vmatpush1.bf16.msra.mxu0 %v1742
  %2688 = vmatprep.subr.bf16.mxu0 %v1751
  %2689 = vmatpush1.bf16.msra.mxu0 %v1750
  %2690 = vmatprep.subr.bf16.mxu0 %v1759
  %2691 = vmatpush1.bf16.msra.mxu0 %v1758
  %2692 = vmatprep.mubr.bf16.mxu0 %v471
  %2693 = vmatmul.mubr.bf16.gmra.mrb[0].mxu0 %v470
  %v2694 = vpop.f32.mrb[0].mxu0
  %v2695 = vadd.f32 %v431, %v2694
  %v2696 = vpop.f32.mrb[0].mxu0
  %v2697 = vadd.f32 %v435, %v2696
  %v2698 = vpop.f32.mrb[0].mxu0
  %v2699 = vadd.f32 %v431, %v2698
  %v2700 = vpop.f32.mrb[0].mxu0
  %v2701 = vadd.f32 %v435, %v2700
  %2702 = vdwg.mxu0
  %2703 = vmatprep.subr.bf16.mxu0 %v1767
  %2704 = vmatpush1.bf16.msra.mxu0 %v1766
  %2705 = vmatprep.subr.bf16.mxu0 %v1775
  %2706 = vmatpush1.bf16.msra.mxu0 %v1774
  %2707 = vmatprep.subr.bf16.mxu0 %v1783
  %2708 = vmatpush1.bf16.msra.mxu0 %v1782
  %2709 = vmatprep.subr.bf16.mxu0 %v1791
  %2710 = vmatpush1.bf16.msra.mxu0 %v1790
  %2711 = vmatprep.subr.bf16.mxu0 %v1799
  %2712 = vmatpush1.bf16.msra.mxu0 %v1798
  %2713 = vmatprep.subr.bf16.mxu0 %v1807
  %2714 = vmatpush1.bf16.msra.mxu0 %v1806
  %2715 = vmatprep.subr.bf16.mxu0 %v1815
  %2716 = vmatpush1.bf16.msra.mxu0 %v1814
  %2717 = vmatprep.subr.bf16.mxu0 %v1823
  %2718 = vmatpush1.bf16.msra.mxu0 %v1822
  %2719 = vmatprep.subr.bf16.mxu0 %v1831
  %2720 = vmatpush1.bf16.msra.mxu0 %v1830
  %2721 = vmatprep.subr.bf16.mxu0 %v1839
  %2722 = vmatpush1.bf16.msra.mxu0 %v1838
  %2723 = vmatprep.subr.bf16.mxu0 %v1847
  %2724 = vmatpush1.bf16.msra.mxu0 %v1846
  %2725 = vmatprep.subr.bf16.mxu0 %v1855
  %2726 = vmatpush1.bf16.msra.mxu0 %v1854
  %2727 = vmatprep.subr.bf16.mxu0 %v1863
  %2728 = vmatpush1.bf16.msra.mxu0 %v1862
  %2729 = vmatprep.subr.bf16.mxu0 %v1871
  %2730 = vmatpush1.bf16.msra.mxu0 %v1870
  %2731 = vmatprep.subr.bf16.mxu0 %v1879
  %2732 = vmatpush1.bf16.msra.mxu0 %v1878
  %2733 = vmatprep.subr.bf16.mxu0 %v1887
  %2734 = vmatpush1.bf16.msra.mxu0 %v1886
  %2735 = vmatprep.mubr.bf16.mxu0 %v473
  %2736 = vmatmul.mubr.bf16.gmra.mrb[0].mxu0 %v472
  %v2737 = vpop.f32.mrb[0].mxu0
  %v2738 = vadd.f32 %v2695, %v2737
  %v2739 = vpop.f32.mrb[0].mxu0
  %v2740 = vadd.f32 %v2697, %v2739
  %v2741 = vpop.f32.mrb[0].mxu0
  %v2742 = vadd.f32 %v2699, %v2741
  %v2743 = vpop.f32.mrb[0].mxu0
  %v2744 = vadd.f32 %v2701, %v2743
  %2745 = vdwg.mxu0
  %2746 = vmatprep.subr.bf16.mxu0 %v1895
  %2747 = vmatpush1.bf16.msra.mxu0 %v1894
  %2748 = vmatprep.subr.bf16.mxu0 %v1903
  %2749 = vmatpush1.bf16.msra.mxu0 %v1902
  %2750 = vmatprep.subr.bf16.mxu0 %v1911
  %2751 = vmatpush1.bf16.msra.mxu0 %v1910
  %2752 = vmatprep.subr.bf16.mxu0 %v1919
  %2753 = vmatpush1.bf16.msra.mxu0 %v1918
  %2754 = vmatprep.subr.bf16.mxu0 %v1927
  %2755 = vmatpush1.bf16.msra.mxu0 %v1926
  %2756 = vmatprep.subr.bf16.mxu0 %v1935
  %2757 = vmatpush1.bf16.msra.mxu0 %v1934
  %2758 = vmatprep.subr.bf16.mxu0 %v1943
  %2759 = vmatpush1.bf16.msra.mxu0 %v1942
  %2760 = vmatprep.subr.bf16.mxu0 %v1951
  %2761 = vmatpush1.bf16.msra.mxu0 %v1950
  %2762 = vmatprep.subr.bf16.mxu0 %v1959
  %2763 = vmatpush1.bf16.msra.mxu0 %v1958
  %2764 = vmatprep.subr.bf16.mxu0 %v1967
  %2765 = vmatpush1.bf16.msra.mxu0 %v1966
  %2766 = vmatprep.subr.bf16.mxu0 %v1975
  %2767 = vmatpush1.bf16.msra.mxu0 %v1974
  %2768 = vmatprep.subr.bf16.mxu0 %v1983
  %2769 = vmatpush1.bf16.msra.mxu0 %v1982
  %2770 = vmatprep.subr.bf16.mxu0 %v1991
  %2771 = vmatpush1.bf16.msra.mxu0 %v1990
  %2772 = vmatprep.subr.bf16.mxu0 %v1999
  %2773 = vmatpush1.bf16.msra.mxu0 %v1998
  %2774 = vmatprep.subr.bf16.mxu0 %v2007
  %2775 = vmatpush1.bf16.msra.mxu0 %v2006
  %2776 = vmatprep.subr.bf16.mxu0 %v2015
  %2777 = vmatpush1.bf16.msra.mxu0 %v2014
  %2778 = vmatprep.mubr.bf16.mxu0 %v475
  %2779 = vmatmul.mubr.bf16.gmra.mrb[0].mxu0 %v474
  %v2780 = vpop.f32.mrb[0].mxu0
  %v2781 = vadd.f32 %v2738, %v2780
  %v2782 = vpop.f32.mrb[0].mxu0
  %v2783 = vadd.f32 %v2740, %v2782
  %v2784 = vpop.f32.mrb[0].mxu0
  %v2785 = vadd.f32 %v2742, %v2784
  %v2786 = vpop.f32.mrb[0].mxu0
  %v2787 = vadd.f32 %v2744, %v2786
  %2788 = vdwg.mxu0
  %2789 = vmatprep.subr.bf16.mxu0 %v1641
  %2790 = vmatpush1.bf16.msra.mxu0 %v1640
  %2791 = vmatprep.subr.bf16.mxu0 %v1649
  %2792 = vmatpush1.bf16.msra.mxu0 %v1648
  %2793 = vmatprep.subr.bf16.mxu0 %v1657
  %2794 = vmatpush1.bf16.msra.mxu0 %v1656
  %2795 = vmatprep.subr.bf16.mxu0 %v1665
  %2796 = vmatpush1.bf16.msra.mxu0 %v1664
  %2797 = vmatprep.subr.bf16.mxu0 %v1673
  %2798 = vmatpush1.bf16.msra.mxu0 %v1672
  %2799 = vmatprep.subr.bf16.mxu0 %v1681
  %2800 = vmatpush1.bf16.msra.mxu0 %v1680
  %2801 = vmatprep.subr.bf16.mxu0 %v1689
  %2802 = vmatpush1.bf16.msra.mxu0 %v1688
  %2803 = vmatprep.subr.bf16.mxu0 %v1697
  %2804 = vmatpush1.bf16.msra.mxu0 %v1696
  %2805 = vmatprep.subr.bf16.mxu0 %v1705
  %2806 = vmatpush1.bf16.msra.mxu0 %v1704
  %2807 = vmatprep.subr.bf16.mxu0 %v1713
  %2808 = vmatpush1.bf16.msra.mxu0 %v1712
  %2809 = vmatprep.subr.bf16.mxu0 %v1721
  %2810 = vmatpush1.bf16.msra.mxu0 %v1720
  %2811 = vmatprep.subr.bf16.mxu0 %v1729
  %2812 = vmatpush1.bf16.msra.mxu0 %v1728
  %2813 = vmatprep.subr.bf16.mxu0 %v1737
  %2814 = vmatpush1.bf16.msra.mxu0 %v1736
  %2815 = vmatprep.subr.bf16.mxu0 %v1745
  %2816 = vmatpush1.bf16.msra.mxu0 %v1744
  %2817 = vmatprep.subr.bf16.mxu0 %v1753
  %2818 = vmatpush1.bf16.msra.mxu0 %v1752
  %2819 = vmatprep.subr.bf16.mxu0 %v1761
  %2820 = vmatpush1.bf16.msra.mxu0 %v1760
  %2821 = vmatprep.mubr.bf16.mxu0 %v471
  %2822 = vmatmul.mubr.bf16.gmra.mrb[0].mxu0 %v470
  %v2823 = vpop.f32.mrb[0].mxu0
  %v2824 = vadd.f32 %v439, %v2823
  %v2825 = vpop.f32.mrb[0].mxu0
  %v2826 = vadd.f32 %v443, %v2825
  %v2827 = vpop.f32.mrb[0].mxu0
  %v2828 = vadd.f32 %v439, %v2827
  %v2829 = vpop.f32.mrb[0].mxu0
  %v2830 = vadd.f32 %v443, %v2829
  %2831 = vdwg.mxu0
  %2832 = vmatprep.subr.bf16.mxu0 %v1769
  %2833 = vmatpush1.bf16.msra.mxu0 %v1768
  %2834 = vmatprep.subr.bf16.mxu0 %v1777
  %2835 = vmatpush1.bf16.msra.mxu0 %v1776
  %2836 = vmatprep.subr.bf16.mxu0 %v1785
  %2837 = vmatpush1.bf16.msra.mxu0 %v1784
  %2838 = vmatprep.subr.bf16.mxu0 %v1793
  %2839 = vmatpush1.bf16.msra.mxu0 %v1792
  %2840 = vmatprep.subr.bf16.mxu0 %v1801
  %2841 = vmatpush1.bf16.msra.mxu0 %v1800
  %2842 = vmatprep.subr.bf16.mxu0 %v1809
  %2843 = vmatpush1.bf16.msra.mxu0 %v1808
  %2844 = vmatprep.subr.bf16.mxu0 %v1817
  %2845 = vmatpush1.bf16.msra.mxu0 %v1816
  %2846 = vmatprep.subr.bf16.mxu0 %v1825
  %2847 = vmatpush1.bf16.msra.mxu0 %v1824
  %2848 = vmatprep.subr.bf16.mxu0 %v1833
  %2849 = vmatpush1.bf16.msra.mxu0 %v1832
  %2850 = vmatprep.subr.bf16.mxu0 %v1841
  %2851 = vmatpush1.bf16.msra.mxu0 %v1840
  %2852 = vmatprep.subr.bf16.mxu0 %v1849
  %2853 = vmatpush1.bf16.msra.mxu0 %v1848
  %2854 = vmatprep.subr.bf16.mxu0 %v1857
  %2855 = vmatpush1.bf16.msra.mxu0 %v1856
  %2856 = vmatprep.subr.bf16.mxu0 %v1865
  %2857 = vmatpush1.bf16.msra.mxu0 %v1864
  %2858 = vmatprep.subr.bf16.mxu0 %v1873
  %2859 = vmatpush1.bf16.msra.mxu0 %v1872
  %2860 = vmatprep.subr.bf16.mxu0 %v1881
  %2861 = vmatpush1.bf16.msra.mxu0 %v1880
  %2862 = vmatprep.subr.bf16.mxu0 %v1889
  %2863 = vmatpush1.bf16.msra.mxu0 %v1888
  %2864 = vmatprep.mubr.bf16.mxu0 %v473
  %2865 = vmatmul.mubr.bf16.gmra.mrb[0].mxu0 %v472
  %v2866 = vpop.f32.mrb[0].mxu0
  %v2867 = vadd.f32 %v2824, %v2866
  %v2868 = vpop.f32.mrb[0].mxu0
  %v2869 = vadd.f32 %v2826, %v2868
  %v2870 = vpop.f32.mrb[0].mxu0
  %v2871 = vadd.f32 %v2828, %v2870
  %v2872 = vpop.f32.mrb[0].mxu0
  %v2873 = vadd.f32 %v2830, %v2872
  %2874 = vdwg.mxu0
  %2875 = vmatprep.subr.bf16.mxu0 %v1897
  %2876 = vmatpush1.bf16.msra.mxu0 %v1896
  %2877 = vmatprep.subr.bf16.mxu0 %v1905
  %2878 = vmatpush1.bf16.msra.mxu0 %v1904
  %2879 = vmatprep.subr.bf16.mxu0 %v1913
  %2880 = vmatpush1.bf16.msra.mxu0 %v1912
  %2881 = vmatprep.subr.bf16.mxu0 %v1921
  %2882 = vmatpush1.bf16.msra.mxu0 %v1920
  %2883 = vmatprep.subr.bf16.mxu0 %v1929
  %2884 = vmatpush1.bf16.msra.mxu0 %v1928
  %2885 = vmatprep.subr.bf16.mxu0 %v1937
  %2886 = vmatpush1.bf16.msra.mxu0 %v1936
  %2887 = vmatprep.subr.bf16.mxu0 %v1945
  %2888 = vmatpush1.bf16.msra.mxu0 %v1944
  %2889 = vmatprep.subr.bf16.mxu0 %v1953
  %2890 = vmatpush1.bf16.msra.mxu0 %v1952
  %2891 = vmatprep.subr.bf16.mxu0 %v1961
  %2892 = vmatpush1.bf16.msra.mxu0 %v1960
  %2893 = vmatprep.subr.bf16.mxu0 %v1969
  %2894 = vmatpush1.bf16.msra.mxu0 %v1968
  %2895 = vmatprep.subr.bf16.mxu0 %v1977
  %2896 = vmatpush1.bf16.msra.mxu0 %v1976
  %2897 = vmatprep.subr.bf16.mxu0 %v1985
  %2898 = vmatpush1.bf16.msra.mxu0 %v1984
  %2899 = vmatprep.subr.bf16.mxu0 %v1993
  %2900 = vmatpush1.bf16.msra.mxu0 %v1992
  %2901 = vmatprep.subr.bf16.mxu0 %v2001
  %2902 = vmatpush1.bf16.msra.mxu0 %v2000
  %2903 = vmatprep.subr.bf16.mxu0 %v2009
  %2904 = vmatpush1.bf16.msra.mxu0 %v2008
  %2905 = vmatprep.subr.bf16.mxu0 %v2017
  %2906 = vmatpush1.bf16.msra.mxu0 %v2016
  %2907 = vmatprep.mubr.bf16.mxu0 %v475
  %2908 = vmatmul.mubr.bf16.gmra.mrb[0].mxu0 %v474
  %v2909 = vpop.f32.mrb[0].mxu0
  %v2910 = vadd.f32 %v2867, %v2909
  %v2911 = vpop.f32.mrb[0].mxu0
  %v2912 = vadd.f32 %v2869, %v2911
  %v2913 = vpop.f32.mrb[0].mxu0
  %v2914 = vadd.f32 %v2871, %v2913
  %v2915 = vpop.f32.mrb[0].mxu0
  %v2916 = vadd.f32 %v2873, %v2915
  %2917 = vdwg.mxu0
  %v2918 = vmax.f32 %v2523, 0.0
  %v2919 = vmax.f32 %v2525, 0.0
  %v2920 = vmax.f32 %v2652, 0.0
  %v2921 = vmax.f32 %v2654, 0.0
  %v2922 = vmax.f32 %v2781, 0.0
  %v2923 = vmax.f32 %v2783, 0.0
  %v2924 = vmax.f32 %v2910, 0.0
  %v2925 = vmax.f32 %v2912, 0.0
  %v2926 = vmax.f32 %v2527, 0.0
  %v2927 = vmax.f32 %v2529, 0.0
  %v2928 = vmax.f32 %v2656, 0.0
  %v2929 = vmax.f32 %v2658, 0.0
  %v2930 = vmax.f32 %v2785, 0.0
  %v2931 = vmax.f32 %v2787, 0.0
  %v2932 = vmax.f32 %v2914, 0.0
  %v2933 = vmax.f32 %v2916, 0.0
  %v2934 = vld [vmem:[%s3] sm:$0xff]
  %v2935 = vld [vmem:[%s3 + $0x8] sm:$0xff]
  %v2936 = vld [vmem:[%s3 + $0x10] sm:$0xff]
  %v2937 = vld [vmem:[%s3 + $0x18] sm:$0xff]
  %v2938 = vld [vmem:[%s3 + $0x20] sm:$0xff]
  %v2939 = vld [vmem:[%s3 + $0x28] sm:$0xff]
  %v2940 = vld [vmem:[%s3 + $0x30] sm:$0xff]
  %v2941 = vld [vmem:[%s3 + $0x38] sm:$0xff]
  %v2942 = vld [vmem:[%s3 + $0x40] sm:$0xff]
  %v2943 = vld [vmem:[%s3 + $0x48] sm:$0xff]
  %v2944 = vld [vmem:[%s3 + $0x50] sm:$0xff]
  %v2945 = vld [vmem:[%s3 + $0x58] sm:$0xff]
  %v2946 = vld [vmem:[%s3 + $0x60] sm:$0xff]
  %v2947 = vld [vmem:[%s3 + $0x68] sm:$0xff]
  %v2948 = vld [vmem:[%s3 + $0x70] sm:$0xff]
  %v2949 = vld [vmem:[%s3 + $0x78] sm:$0xff]
  %v2950 = vld [vmem:[%s3 + $0x80] sm:$0xff]
  %v2951 = vld [vmem:[%s3 + $0x88] sm:$0xff]
  %v2952 = vld [vmem:[%s3 + $0x90] sm:$0xff]
  %v2953 = vld [vmem:[%s3 + $0x98] sm:$0xff]
  %v2954 = vld [vmem:[%s3 + $0xa0] sm:$0xff]
  %v2955 = vld [vmem:[%s3 + $0xa8] sm:$0xff]
  %v2956 = vld [vmem:[%s3 + $0xb0] sm:$0xff]
  %v2957 = vld [vmem:[%s3 + $0xb8] sm:$0xff]
  %v2958 = vld [vmem:[%s3 + $0xc0] sm:$0xff]
  %v2959 = vld [vmem:[%s3 + $0xc8] sm:$0xff]
  %v2960 = vld [vmem:[%s3 + $0xd0] sm:$0xff]
  %v2961 = vld [vmem:[%s3 + $0xd8] sm:$0xff]
  %v2962 = vld [vmem:[%s3 + $0xe0] sm:$0xff]
  %v2963 = vld [vmem:[%s3 + $0xe8] sm:$0xff]
  %v2964 = vld [vmem:[%s3 + $0xf0] sm:$0xff]
  %v2965 = vld [vmem:[%s3 + $0xf8] sm:$0xff]
  %v2966 = vld [vmem:[%s3 + $0x100] sm:$0xff]
  %v2967 = vld [vmem:[%s3 + $0x108] sm:$0xff]
  %v2968 = vld [vmem:[%s3 + $0x110] sm:$0xff]
  %v2969 = vld [vmem:[%s3 + $0x118] sm:$0xff]
  %v2970 = vld [vmem:[%s3 + $0x120] sm:$0xff]
  %v2971 = vld [vmem:[%s3 + $0x128] sm:$0xff]
  %v2972 = vld [vmem:[%s3 + $0x130] sm:$0xff]
  %v2973 = vld [vmem:[%s3 + $0x138] sm:$0xff]
  %v2974 = vld [vmem:[%s3 + $0x140] sm:$0xff]
  %v2975 = vld [vmem:[%s3 + $0x148] sm:$0xff]
  %v2976 = vld [vmem:[%s3 + $0x150] sm:$0xff]
  %v2977 = vld [vmem:[%s3 + $0x158] sm:$0xff]
  %v2978 = vld [vmem:[%s3 + $0x160] sm:$0xff]
  %v2979 = vld [vmem:[%s3 + $0x168] sm:$0xff]
  %v2980 = vld [vmem:[%s3 + $0x170] sm:$0xff]
  %v2981 = vld [vmem:[%s3 + $0x178] sm:$0xff]
  %v2982 = vld [vmem:[%s3 + $0x180] sm:$0xff]
  %v2983 = vld [vmem:[%s3 + $0x188] sm:$0xff]
  %v2984 = vld [vmem:[%s3 + $0x190] sm:$0xff]
  %v2985 = vld [vmem:[%s3 + $0x198] sm:$0xff]
  %v2986 = vld [vmem:[%s3 + $0x1a0] sm:$0xff]
  %v2987 = vld [vmem:[%s3 + $0x1a8] sm:$0xff]
  %v2988 = vld [vmem:[%s3 + $0x1b0] sm:$0xff]
  %v2989 = vld [vmem:[%s3 + $0x1b8] sm:$0xff]
  %v2990 = vld [vmem:[%s3 + $0x1c0] sm:$0xff]
  %v2991 = vld [vmem:[%s3 + $0x1c8] sm:$0xff]
  %v2992 = vld [vmem:[%s3 + $0x1d0] sm:$0xff]
  %v2993 = vld [vmem:[%s3 + $0x1d8] sm:$0xff]
  %v2994 = vld [vmem:[%s3 + $0x1e0] sm:$0xff]
  %v2995 = vld [vmem:[%s3 + $0x1e8] sm:$0xff]
  %v2996 = vld [vmem:[%s3 + $0x1f0] sm:$0xff]
  %v2997 = vld [vmem:[%s3 + $0x1f8] sm:$0xff]
  %v2998 = vld [vmem:[%s3 + $0x200] sm:$0xff]
  %v2999 = vld [vmem:[%s3 + $0x208] sm:$0xff]
  %v3000 = vld [vmem:[%s3 + $0x210] sm:$0xff]
  %v3001 = vld [vmem:[%s3 + $0x218] sm:$0xff]
  %v3002 = vld [vmem:[%s3 + $0x220] sm:$0xff]
  %v3003 = vld [vmem:[%s3 + $0x228] sm:$0xff]
  %v3004 = vld [vmem:[%s3 + $0x230] sm:$0xff]
  %v3005 = vld [vmem:[%s3 + $0x238] sm:$0xff]
  %v3006 = vld [vmem:[%s3 + $0x240] sm:$0xff]
  %v3007 = vld [vmem:[%s3 + $0x248] sm:$0xff]
  %v3008 = vld [vmem:[%s3 + $0x250] sm:$0xff]
  %v3009 = vld [vmem:[%s3 + $0x258] sm:$0xff]
  %v3010 = vld [vmem:[%s3 + $0x260] sm:$0xff]
  %v3011 = vld [vmem:[%s3 + $0x268] sm:$0xff]
  %v3012 = vld [vmem:[%s3 + $0x270] sm:$0xff]
  %v3013 = vld [vmem:[%s3 + $0x278] sm:$0xff]
  %v3014 = vld [vmem:[%s3 + $0x280] sm:$0xff]
  %v3015 = vld [vmem:[%s3 + $0x288] sm:$0xff]
  %v3016 = vld [vmem:[%s3 + $0x290] sm:$0xff]
  %v3017 = vld [vmem:[%s3 + $0x298] sm:$0xff]
  %v3018 = vld [vmem:[%s3 + $0x2a0] sm:$0xff]
  %v3019 = vld [vmem:[%s3 + $0x2a8] sm:$0xff]
  %v3020 = vld [vmem:[%s3 + $0x2b0] sm:$0xff]
  %v3021 = vld [vmem:[%s3 + $0x2b8] sm:$0xff]
  %v3022 = vld [vmem:[%s3 + $0x2c0] sm:$0xff]
  %v3023 = vld [vmem:[%s3 + $0x2c8] sm:$0xff]
  %v3024 = vld [vmem:[%s3 + $0x2d0] sm:$0xff]
  %v3025 = vld [vmem:[%s3 + $0x2d8] sm:$0xff]
  %v3026 = vld [vmem:[%s3 + $0x2e0] sm:$0xff]
  %v3027 = vld [vmem:[%s3 + $0x2e8] sm:$0xff]
  %v3028 = vld [vmem:[%s3 + $0x2f0] sm:$0xff]
  %v3029 = vld [vmem:[%s3 + $0x2f8] sm:$0xff]
  %v3030 = vld [vmem:[%s3 + $0x300] sm:$0xff]
  %v3031 = vld [vmem:[%s3 + $0x308] sm:$0xff]
  %v3032 = vld [vmem:[%s3 + $0x310] sm:$0xff]
  %v3033 = vld [vmem:[%s3 + $0x318] sm:$0xff]
  %v3034 = vld [vmem:[%s3 + $0x320] sm:$0xff]
  %v3035 = vld [vmem:[%s3 + $0x328] sm:$0xff]
  %v3036 = vld [vmem:[%s3 + $0x330] sm:$0xff]
  %v3037 = vld [vmem:[%s3 + $0x338] sm:$0xff]
  %v3038 = vld [vmem:[%s3 + $0x340] sm:$0xff]
  %v3039 = vld [vmem:[%s3 + $0x348] sm:$0xff]
  %v3040 = vld [vmem:[%s3 + $0x350] sm:$0xff]
  %v3041 = vld [vmem:[%s3 + $0x358] sm:$0xff]
  %v3042 = vld [vmem:[%s3 + $0x360] sm:$0xff]
  %v3043 = vld [vmem:[%s3 + $0x368] sm:$0xff]
  %v3044 = vld [vmem:[%s3 + $0x370] sm:$0xff]
  %v3045 = vld [vmem:[%s3 + $0x378] sm:$0xff]
  %v3046 = vld [vmem:[%s3 + $0x380] sm:$0xff]
  %v3047 = vld [vmem:[%s3 + $0x388] sm:$0xff]
  %v3048 = vld [vmem:[%s3 + $0x390] sm:$0xff]
  %v3049 = vld [vmem:[%s3 + $0x398] sm:$0xff]
  %v3050 = vld [vmem:[%s3 + $0x3a0] sm:$0xff]
  %v3051 = vld [vmem:[%s3 + $0x3a8] sm:$0xff]
  %v3052 = vld [vmem:[%s3 + $0x3b0] sm:$0xff]
  %v3053 = vld [vmem:[%s3 + $0x3b8] sm:$0xff]
  %v3054 = vld [vmem:[%s3 + $0x3c0] sm:$0xff]
  %v3055 = vld [vmem:[%s3 + $0x3c8] sm:$0xff]
  %v3056 = vld [vmem:[%s3 + $0x3d0] sm:$0xff]
  %v3057 = vld [vmem:[%s3 + $0x3d8] sm:$0xff]
  %v3058 = vld [vmem:[%s3 + $0x3e0] sm:$0xff]
  %v3059 = vld [vmem:[%s3 + $0x3e8] sm:$0xff]
  %v3060 = vld [vmem:[%s3 + $0x3f0] sm:$0xff]
  %v3061 = vld [vmem:[%s3 + $0x3f8] sm:$0xff]
  %v3062 = vld [vmem:[%s4] sm:$0x1]
  %v3064 = vlaneseq
  %v3065 = vshrl.u32 %v3064, 7
  %v3066 = vsub.s32 0, %v3065
  %v3067 = vrot.slane %v3062, %v3066
  %3069 = vmatprep.subr.mxu0 0.0
  %3070 = vmatpush1.msra.mxu0 %v2934
  %3071 = vmatprep.subr.mxu0 0.0
  %3072 = vmatpush1.msra.mxu0 %v2935
  %3073 = vmatprep.subr.mxu0 0.0
  %3074 = vmatpush1.msra.mxu0 %v2936
  %3075 = vmatprep.subr.mxu0 0.0
  %3076 = vmatpush1.msra.mxu0 %v2937
  %3077 = vmatprep.subr.mxu0 0.0
  %3078 = vmatpush1.msra.mxu0 %v2938
  %3079 = vmatprep.subr.mxu0 0.0
  %3080 = vmatpush1.msra.mxu0 %v2939
  %3081 = vmatprep.subr.mxu0 0.0
  %3082 = vmatpush1.msra.mxu0 %v2940
  %3083 = vmatprep.subr.mxu0 0.0
  %3084 = vmatpush1.msra.mxu0 %v2941
  %3085 = vmatprep.subr.mxu0 0.0
  %3086 = vmatpush1.msra.mxu0 %v2942
  %3087 = vmatprep.subr.mxu0 0.0
  %3088 = vmatpush1.msra.mxu0 %v2943
  %3089 = vmatprep.subr.mxu0 0.0
  %3090 = vmatpush1.msra.mxu0 %v2944
  %3091 = vmatprep.subr.mxu0 0.0
  %3092 = vmatpush1.msra.mxu0 %v2945
  %3093 = vmatprep.subr.mxu0 0.0
  %3094 = vmatpush1.msra.mxu0 %v2946
  %3095 = vmatprep.subr.mxu0 0.0
  %3096 = vmatpush1.msra.mxu0 %v2947
  %3097 = vmatprep.subr.mxu0 0.0
  %3098 = vmatpush1.msra.mxu0 %v2948
  %3099 = vmatprep.subr.mxu0 0.0
  %3100 = vmatpush1.msra.mxu0 %v2949
  %3101 = vmatprep.subr.mxu0 0.0
  %3102 = vmatpush1.msra.mxu0 %v2950
  %3103 = vmatprep.subr.mxu0 0.0
  %3104 = vmatpush1.msra.mxu0 %v2951
  %3105 = vmatprep.subr.mxu0 0.0
  %3106 = vmatpush1.msra.mxu0 %v2952
  %3107 = vmatprep.subr.mxu0 0.0
  %3108 = vmatpush1.msra.mxu0 %v2953
  %3109 = vmatprep.subr.mxu0 0.0
  %3110 = vmatpush1.msra.mxu0 %v2954
  %3111 = vmatprep.subr.mxu0 0.0
  %3112 = vmatpush1.msra.mxu0 %v2955
  %3113 = vmatprep.subr.mxu0 0.0
  %3114 = vmatpush1.msra.mxu0 %v2956
  %3115 = vmatprep.subr.mxu0 0.0
  %3116 = vmatpush1.msra.mxu0 %v2957
  %3117 = vmatprep.subr.mxu0 0.0
  %3118 = vmatpush1.msra.mxu0 %v2958
  %3119 = vmatprep.subr.mxu0 0.0
  %3120 = vmatpush1.msra.mxu0 %v2959
  %3121 = vmatprep.subr.mxu0 0.0
  %3122 = vmatpush1.msra.mxu0 %v2960
  %3123 = vmatprep.subr.mxu0 0.0
  %3124 = vmatpush1.msra.mxu0 %v2961
  %3125 = vmatprep.subr.mxu0 0.0
  %3126 = vmatpush1.msra.mxu0 %v2962
  %3127 = vmatprep.subr.mxu0 0.0
  %3128 = vmatpush1.msra.mxu0 %v2963
  %3129 = vmatprep.subr.mxu0 0.0
  %3130 = vmatpush1.msra.mxu0 %v2964
  %3131 = vmatprep.subr.mxu0 0.0
  %3132 = vmatpush1.msra.mxu0 %v2965
  %3133 = vmatprep.mubr.f32.mxu0 %v2919
  %3134 = vmatmul.mubr.f32.gmra.mrb[0].mxu0 %v2918
  %v3135 = vpop.f32.mrb[0].mxu0
  %v3136 = vadd.f32 %v3067, %v3135
  %v3137 = vpop.f32.mrb[0].mxu0
  %3138 = vmatprep.mubr.f32.mxu0 %v2927
  %3139 = vmatmul.mubr.f32.gmra.mrb[0].mxu0 %v2926
  %v3140 = vpop.f32.mrb[0].mxu0
  %v3141 = vadd.f32 %v3067, %v3140
  %v3142 = vpop.f32.mrb[0].mxu0
  %3143 = vdwg.mxu0
  %3144 = vmatprep.subr.mxu0 0.0
  %3145 = vmatpush1.msra.mxu0 %v2966
  %3146 = vmatprep.subr.mxu0 0.0
  %3147 = vmatpush1.msra.mxu0 %v2967
  %3148 = vmatprep.subr.mxu0 0.0
  %3149 = vmatpush1.msra.mxu0 %v2968
  %3150 = vmatprep.subr.mxu0 0.0
  %3151 = vmatpush1.msra.mxu0 %v2969
  %3152 = vmatprep.subr.mxu0 0.0
  %3153 = vmatpush1.msra.mxu0 %v2970
  %3154 = vmatprep.subr.mxu0 0.0
  %3155 = vmatpush1.msra.mxu0 %v2971
  %3156 = vmatprep.subr.mxu0 0.0
  %3157 = vmatpush1.msra.mxu0 %v2972
  %3158 = vmatprep.subr.mxu0 0.0
  %3159 = vmatpush1.msra.mxu0 %v2973
  %3160 = vmatprep.subr.mxu0 0.0
  %3161 = vmatpush1.msra.mxu0 %v2974
  %3162 = vmatprep.subr.mxu0 0.0
  %3163 = vmatpush1.msra.mxu0 %v2975
  %3164 = vmatprep.subr.mxu0 0.0
  %3165 = vmatpush1.msra.mxu0 %v2976
  %3166 = vmatprep.subr.mxu0 0.0
  %3167 = vmatpush1.msra.mxu0 %v2977
  %3168 = vmatprep.subr.mxu0 0.0
  %3169 = vmatpush1.msra.mxu0 %v2978
  %3170 = vmatprep.subr.mxu0 0.0
  %3171 = vmatpush1.msra.mxu0 %v2979
  %3172 = vmatprep.subr.mxu0 0.0
  %3173 = vmatpush1.msra.mxu0 %v2980
  %3174 = vmatprep.subr.mxu0 0.0
  %3175 = vmatpush1.msra.mxu0 %v2981
  %3176 = vmatprep.subr.mxu0 0.0
  %3177 = vmatpush1.msra.mxu0 %v2982
  %3178 = vmatprep.subr.mxu0 0.0
  %3179 = vmatpush1.msra.mxu0 %v2983
  %3180 = vmatprep.subr.mxu0 0.0
  %3181 = vmatpush1.msra.mxu0 %v2984
  %3182 = vmatprep.subr.mxu0 0.0
  %3183 = vmatpush1.msra.mxu0 %v2985
  %3184 = vmatprep.subr.mxu0 0.0
  %3185 = vmatpush1.msra.mxu0 %v2986
  %3186 = vmatprep.subr.mxu0 0.0
  %3187 = vmatpush1.msra.mxu0 %v2987
  %3188 = vmatprep.subr.mxu0 0.0
  %3189 = vmatpush1.msra.mxu0 %v2988
  %3190 = vmatprep.subr.mxu0 0.0
  %3191 = vmatpush1.msra.mxu0 %v2989
  %3192 = vmatprep.subr.mxu0 0.0
  %3193 = vmatpush1.msra.mxu0 %v2990
  %3194 = vmatprep.subr.mxu0 0.0
  %3195 = vmatpush1.msra.mxu0 %v2991
  %3196 = vmatprep.subr.mxu0 0.0
  %3197 = vmatpush1.msra.mxu0 %v2992
  %3198 = vmatprep.subr.mxu0 0.0
  %3199 = vmatpush1.msra.mxu0 %v2993
  %3200 = vmatprep.subr.mxu0 0.0
  %3201 = vmatpush1.msra.mxu0 %v2994
  %3202 = vmatprep.subr.mxu0 0.0
  %3203 = vmatpush1.msra.mxu0 %v2995
  %3204 = vmatprep.subr.mxu0 0.0
  %3205 = vmatpush1.msra.mxu0 %v2996
  %3206 = vmatprep.subr.mxu0 0.0
  %3207 = vmatpush1.msra.mxu0 %v2997
  %3208 = vmatprep.mubr.f32.mxu0 %v2921
  %3209 = vmatmul.mubr.f32.gmra.mrb[0].mxu0 %v2920
  %v3210 = vpop.f32.mrb[0].mxu0
  %v3211 = vadd.f32 %v3136, %v3210
  %v3212 = vpop.f32.mrb[0].mxu0
  %3213 = vmatprep.mubr.f32.mxu0 %v2929
  %3214 = vmatmul.mubr.f32.gmra.mrb[0].mxu0 %v2928
  %v3215 = vpop.f32.mrb[0].mxu0
  %v3216 = vadd.f32 %v3141, %v3215
  %v3217 = vpop.f32.mrb[0].mxu0
  %3218 = vdwg.mxu0
  %3219 = vmatprep.subr.mxu0 0.0
  %3220 = vmatpush1.msra.mxu0 %v2998
  %3221 = vmatprep.subr.mxu0 0.0
  %3222 = vmatpush1.msra.mxu0 %v2999
  %3223 = vmatprep.subr.mxu0 0.0
  %3224 = vmatpush1.msra.mxu0 %v3000
  %3225 = vmatprep.subr.mxu0 0.0
  %3226 = vmatpush1.msra.mxu0 %v3001
  %3227 = vmatprep.subr.mxu0 0.0
  %3228 = vmatpush1.msra.mxu0 %v3002
  %3229 = vmatprep.subr.mxu0 0.0
  %3230 = vmatpush1.msra.mxu0 %v3003
  %3231 = vmatprep.subr.mxu0 0.0
  %3232 = vmatpush1.msra.mxu0 %v3004
  %3233 = vmatprep.subr.mxu0 0.0
  %3234 = vmatpush1.msra.mxu0 %v3005
  %3235 = vmatprep.subr.mxu0 0.0
  %3236 = vmatpush1.msra.mxu0 %v3006
  %3237 = vmatprep.subr.mxu0 0.0
  %3238 = vmatpush1.msra.mxu0 %v3007
  %3239 = vmatprep.subr.mxu0 0.0
  %3240 = vmatpush1.msra.mxu0 %v3008
  %3241 = vmatprep.subr.mxu0 0.0
  %3242 = vmatpush1.msra.mxu0 %v3009
  %3243 = vmatprep.subr.mxu0 0.0
  %3244 = vmatpush1.msra.mxu0 %v3010
  %3245 = vmatprep.subr.mxu0 0.0
  %3246 = vmatpush1.msra.mxu0 %v3011
  %3247 = vmatprep.subr.mxu0 0.0
  %3248 = vmatpush1.msra.mxu0 %v3012
  %3249 = vmatprep.subr.mxu0 0.0
  %3250 = vmatpush1.msra.mxu0 %v3013
  %3251 = vmatprep.subr.mxu0 0.0
  %3252 = vmatpush1.msra.mxu0 %v3014
  %3253 = vmatprep.subr.mxu0 0.0
  %3254 = vmatpush1.msra.mxu0 %v3015
  %3255 = vmatprep.subr.mxu0 0.0
  %3256 = vmatpush1.msra.mxu0 %v3016
  %3257 = vmatprep.subr.mxu0 0.0
  %3258 = vmatpush1.msra.mxu0 %v3017
  %3259 = vmatprep.subr.mxu0 0.0
  %3260 = vmatpush1.msra.mxu0 %v3018
  %3261 = vmatprep.subr.mxu0 0.0
  %3262 = vmatpush1.msra.mxu0 %v3019
  %3263 = vmatprep.subr.mxu0 0.0
  %3264 = vmatpush1.msra.mxu0 %v3020
  %3265 = vmatprep.subr.mxu0 0.0
  %3266 = vmatpush1.msra.mxu0 %v3021
  %3267 = vmatprep.subr.mxu0 0.0
  %3268 = vmatpush1.msra.mxu0 %v3022
  %3269 = vmatprep.subr.mxu0 0.0
  %3270 = vmatpush1.msra.mxu0 %v3023
  %3271 = vmatprep.subr.mxu0 0.0
  %3272 = vmatpush1.msra.mxu0 %v3024
  %3273 = vmatprep.subr.mxu0 0.0
  %3274 = vmatpush1.msra.mxu0 %v3025
  %3275 = vmatprep.subr.mxu0 0.0
  %3276 = vmatpush1.msra.mxu0 %v3026
  %3277 = vmatprep.subr.mxu0 0.0
  %3278 = vmatpush1.msra.mxu0 %v3027
  %3279 = vmatprep.subr.mxu0 0.0
  %3280 = vmatpush1.msra.mxu0 %v3028
  %3281 = vmatprep.subr.mxu0 0.0
  %3282 = vmatpush1.msra.mxu0 %v3029
  %3283 = vmatprep.mubr.f32.mxu0 %v2923
  %3284 = vmatmul.mubr.f32.gmra.mrb[0].mxu0 %v2922
  %v3285 = vpop.f32.mrb[0].mxu0
  %v3286 = vadd.f32 %v3211, %v3285
  %v3287 = vpop.f32.mrb[0].mxu0
  %3288 = vmatprep.mubr.f32.mxu0 %v2931
  %3289 = vmatmul.mubr.f32.gmra.mrb[0].mxu0 %v2930
  %v3290 = vpop.f32.mrb[0].mxu0
  %v3291 = vadd.f32 %v3216, %v3290
  %v3292 = vpop.f32.mrb[0].mxu0
  %3293 = vdwg.mxu0
  %3294 = vmatprep.subr.mxu0 0.0
  %3295 = vmatpush1.msra.mxu0 %v3030
  %3296 = vmatprep.subr.mxu0 0.0
  %3297 = vmatpush1.msra.mxu0 %v3031
  %3298 = vmatprep.subr.mxu0 0.0
  %3299 = vmatpush1.msra.mxu0 %v3032
  %3300 = vmatprep.subr.mxu0 0.0
  %3301 = vmatpush1.msra.mxu0 %v3033
  %3302 = vmatprep.subr.mxu0 0.0
  %3303 = vmatpush1.msra.mxu0 %v3034
  %3304 = vmatprep.subr.mxu0 0.0
  %3305 = vmatpush1.msra.mxu0 %v3035
  %3306 = vmatprep.subr.mxu0 0.0
  %3307 = vmatpush1.msra.mxu0 %v3036
  %3308 = vmatprep.subr.mxu0 0.0
  %3309 = vmatpush1.msra.mxu0 %v3037
  %3310 = vmatprep.subr.mxu0 0.0
  %3311 = vmatpush1.msra.mxu0 %v3038
  %3312 = vmatprep.subr.mxu0 0.0
  %3313 = vmatpush1.msra.mxu0 %v3039
  %3314 = vmatprep.subr.mxu0 0.0
  %3315 = vmatpush1.msra.mxu0 %v3040
  %3316 = vmatprep.subr.mxu0 0.0
  %3317 = vmatpush1.msra.mxu0 %v3041
  %3318 = vmatprep.subr.mxu0 0.0
  %3319 = vmatpush1.msra.mxu0 %v3042
  %3320 = vmatprep.subr.mxu0 0.0
  %3321 = vmatpush1.msra.mxu0 %v3043
  %3322 = vmatprep.subr.mxu0 0.0
  %3323 = vmatpush1.msra.mxu0 %v3044
  %3324 = vmatprep.subr.mxu0 0.0
  %3325 = vmatpush1.msra.mxu0 %v3045
  %3326 = vmatprep.subr.mxu0 0.0
  %3327 = vmatpush1.msra.mxu0 %v3046
  %3328 = vmatprep.subr.mxu0 0.0
  %3329 = vmatpush1.msra.mxu0 %v3047
  %3330 = vmatprep.subr.mxu0 0.0
  %3331 = vmatpush1.msra.mxu0 %v3048
  %3332 = vmatprep.subr.mxu0 0.0
  %3333 = vmatpush1.msra.mxu0 %v3049
  %3334 = vmatprep.subr.mxu0 0.0
  %3335 = vmatpush1.msra.mxu0 %v3050
  %3336 = vmatprep.subr.mxu0 0.0
  %3337 = vmatpush1.msra.mxu0 %v3051
  %3338 = vmatprep.subr.mxu0 0.0
  %3339 = vmatpush1.msra.mxu0 %v3052
  %3340 = vmatprep.subr.mxu0 0.0
  %3341 = vmatpush1.msra.mxu0 %v3053
  %3342 = vmatprep.subr.mxu0 0.0
  %3343 = vmatpush1.msra.mxu0 %v3054
  %3344 = vmatprep.subr.mxu0 0.0
  %3345 = vmatpush1.msra.mxu0 %v3055
  %3346 = vmatprep.subr.mxu0 0.0
  %3347 = vmatpush1.msra.mxu0 %v3056
  %3348 = vmatprep.subr.mxu0 0.0
  %3349 = vmatpush1.msra.mxu0 %v3057
  %3350 = vmatprep.subr.mxu0 0.0
  %3351 = vmatpush1.msra.mxu0 %v3058
  %3352 = vmatprep.subr.mxu0 0.0
  %3353 = vmatpush1.msra.mxu0 %v3059
  %3354 = vmatprep.subr.mxu0 0.0
  %3355 = vmatpush1.msra.mxu0 %v3060
  %3356 = vmatprep.subr.mxu0 0.0
  %3357 = vmatpush1.msra.mxu0 %v3061
  %3358 = vmatprep.mubr.f32.mxu0 %v2925
  %3359 = vmatmul.mubr.f32.gmra.mrb[0].mxu0 %v2924
  %v3360 = vpop.f32.mrb[0].mxu0
  %v3361 = vadd.f32 %v3286, %v3360
  %v3362 = vpop.f32.mrb[0].mxu0
  %3363 = vmatprep.mubr.f32.mxu0 %v2933
  %3364 = vmatmul.mubr.f32.gmra.mrb[0].mxu0 %v2932
  %v3365 = vpop.f32.mrb[0].mxu0
  %v3366 = vadd.f32 %v3291, %v3365
  %v3367 = vpop.f32.mrb[0].mxu0
  %3368 = vdwg.mxu0
  %3369 = vst [vmem:[%s5] sm:$0xff] %v3361
  %3370 = vst [vmem:[%s5 + $0x8] sm:$0xff] %v3366
  // Predicated region
  $region22: #{punct_head.1} parent=0 // pred_check
    _
  $region23: #{punct_head.1} parent=0 // pred_check_branch
    %3372 = sbr.rel (0) target = $region25
  $region24: #{punct_head.1} parent=0 // pred_region
    _
  $region25: #{punct_head.1} parent=0 // pred_fallthru
    _
  // Predicated region
  $region26: #{punct_head.1} parent=0 // pred_check
    _
  $region27: #{punct_head.1} parent=0 // pred_check_branch
    %3374 = sbr.rel (0) target = $region29
  $region28: #{punct_head.1} parent=0 // pred_region
    _
  $region29: #{punct_head.1} parent=0 // pred_fallthru
    _

</llo_original>
